<compile_context>
chip_gen: v7x
topology: tpu7x:2x2x1
jax: 0.10.0
libtpu: 0.0.40
codegen_flags: <defaults>
</compile_context>

<pallas_src>
import functools

import numpy as np
import jax
import jax.numpy as jnp
from jax.experimental import pallas as pl
from jax.experimental.pallas import tpu as pltpu


def _round_up(x, m):
    return ((x + m - 1) // m) * m


def _bucket_rows(n):
    """Pad a wave of n nodes to 128 * next_power_of_2(ceil(n/128)) rows."""
    tiles = max(1, -(-n // 128))
    if tiles > 1:
        tiles = 1 << (tiles - 1).bit_length()
    return tiles * 128


def _choose_tile(n_pad):
    """Row-tile size. 256 fills the v6e/v7x MXU M dimension and halves grid
    steps for large waves, but only when that still leaves >= 2 grid steps
    (keeps both v7x TensorCores busy). 128 otherwise (also MXU M on v5e)."""
    if n_pad % 256 == 0 and n_pad >= 512:
        return 256
    return 128


def _vmem_limit_bytes(need):
    """Generation-aware VMEM cap: never below the actual footprint, never
    (much) above what the chip has (v7x has 64 MiB/TC vs 128 MiB on v5e/v6e)."""
    try:
        cap = int(pltpu.get_tpu_info().vmem_capacity_bytes)
    except Exception:
        cap = 128 * 1024 * 1024
    hi = min(48 * 1024 * 1024, (cap * 3) // 4)
    limit = min(max(2 * need, 16 * 1024 * 1024), hi)
    return int(max(limit, need + (2 << 20)))


# -----------------------------------------------------------------------------
# Pallas kernel: batched binary Tree-LSTM cell
#   three accumulating bf16 MXU dots (x / hl / hr vs packed gate weights),
#   f32 gate math, sigmoid-as-tanh (1 EUP push per gate), split h/c outputs.
# -----------------------------------------------------------------------------
def tree_lstm_kernel(x_ref, hl_ref, hr_ref, cl_ref, cr_ref,
                     wx_ref, wl_ref, wr_ref, b_ref, h_ref, c_ref):
    Hp = cl_ref.shape[-1]
    # fused gate pre-activation: bf16 matmul operands, f32 accumulation
    g = jnp.dot(x_ref[...], wx_ref[...], preferred_element_type=jnp.float32)
    g = g + jnp.dot(hl_ref[...], wl_ref[...], preferred_element_type=jnp.float32)
    g = g + jnp.dot(hr_ref[...], wr_ref[...], preferred_element_type=jnp.float32)
    g = g + b_ref[...]

    def sig(z):  # sigmoid via a single tanh EUP op (instead of exp + divide)
        return 0.5 * jnp.tanh(0.5 * z) + 0.5

    # gate blocks are Hp-wide (lane-aligned whole-vreg slices)
    i = sig(g[:, 0 * Hp:1 * Hp])
    o = sig(g[:, 1 * Hp:2 * Hp])
    u = jnp.tanh(g[:, 2 * Hp:3 * Hp])
    fl = sig(g[:, 3 * Hp:4 * Hp])
    fr = sig(g[:, 4 * Hp:5 * Hp])

    c = i * u + fl * cl_ref[...] + fr * cr_ref[...]
    h = o * jnp.tanh(c)
    h_ref[...] = h.astype(h_ref.dtype)     # bf16 (next wave's MXU operand)
    c_ref[...] = c                          # f32 (bounds recurrence error)


def _tree_lstm_padded(x, hl, hr, cl, cr, wx, wl, wr, b):
    """x/hl/hr: [n_pad, Hp] bf16, cl/cr: [n_pad, Hp] f32,
    wx/wl/wr: [Hp, 5*Hp] bf16, b: [1, 5*Hp] f32
    -> (h [n_pad, Hp] bf16, c [n_pad, Hp] f32)."""
    n_pad, Hp = cl.shape
    tile = _choose_tile(n_pad)

    # explicit VMEM budget: single-buffered resident weights + double-buffered
    # input/output tiles (+ headroom for the [tile, 5*Hp] gate intermediate)
    need = ((wx.size + wl.size + wr.size) * 2 + b.size * 4
            + 2 * (3 * tile * Hp * 2 + 2 * tile * Hp * 4)
            + 2 * (tile * Hp * 2 + tile * Hp * 4)
            + tile * 5 * Hp * 4)

    resident = pl.BlockSpec(memory_space=pltpu.MemorySpace.VMEM)  # no per-step DMA
    row_tile = pl.BlockSpec((tile, Hp), lambda i: (i, 0))

    return pl.pallas_call(
        tree_lstm_kernel,
        out_shape=(jax.ShapeDtypeStruct((n_pad, Hp), jnp.bfloat16),
                   jax.ShapeDtypeStruct((n_pad, Hp), jnp.float32)),
        grid=(n_pad // tile,),
        in_specs=[row_tile, row_tile, row_tile, row_tile, row_tile,
                  resident, resident, resident, resident],
        out_specs=(pl.BlockSpec((tile, Hp), lambda i: (i, 0)),
                   pl.BlockSpec((tile, Hp), lambda i: (i, 0))),
        compiler_params=pltpu.CompilerParams(
            dimension_semantics=("parallel",),
            vmem_limit_bytes=_vmem_limit_bytes(need)),
    )(x, hl, hr, cl, cr, wx, wl, wr, b)


# -----------------------------------------------------------------------------
# Jitted wrappers
# -----------------------------------------------------------------------------
@functools.partial(jax.jit, static_argnames=("n_pad", "hp"))
def _calc_root_jit(x, child_h, child_c, wx, wl, wr, b, *, n_pad, hp):
    N, H = x.shape

    def pf(a, dt):  # pad rows -> n_pad, features -> hp
        return jnp.pad(a, ((0, n_pad - N), (0, hp - H))).astype(dt)

    h, c = _tree_lstm_padded(
        pf(x, jnp.bfloat16), pf(child_h[:, 0], jnp.bfloat16),
        pf(child_h[:, 1], jnp.bfloat16),
        pf(child_c[:, 0], jnp.float32), pf(child_c[:, 1], jnp.float32),
        wx, wl, wr, b)
    return h[:N, :H].astype(jnp.float32), c[:N, :H]


@functools.partial(jax.jit, donate_argnums=(0, 1))
def _forward_waves(h_buf, c_buf, ids, lidx, ridx, tgt, emb, wx, wl, wr, b):
    """Single device program for the whole forest: lax.scan over waves.
    h_buf (bf16) / c_buf (f32) are donated -> in-place scatters."""

    def step(carry, sched):
        hb, cb = carry
        ids_w, l_w, r_w, t_w = sched
        x = jnp.take(emb, ids_w, axis=0)          # bf16 embedding rows
        hl = jnp.take(hb, l_w, axis=0)            # bf16 child h
        hr = jnp.take(hb, r_w, axis=0)
        cl = jnp.take(cb, l_w, axis=0)            # f32 child c
        cr = jnp.take(cb, r_w, axis=0)
        h, c = _tree_lstm_padded(x, hl, hr, cl, cr, wx, wl, wr, b)
        # padded rows all target DUMP_ROW (duplicate indices under .set: one
        # write wins, and DUMP_ROW is never read) -- safe by construction.
        hb = hb.at[t_w].set(h)
        cb = cb.at[t_w].set(c)
        return (hb, cb), None

    (h_buf, c_buf), _ = jax.lax.scan(step, (h_buf, c_buf),
                                     (ids, lidx, ridx, tgt))
    return h_buf, c_buf


# -----------------------------------------------------------------------------
# Tree data structures (host-side scheduling state, mirrors the PyTorch usage)
# -----------------------------------------------------------------------------
class Tree:
    def __init__(self, root, lchild=None, rchild=None, parent=None):
        self.root = root          # token id (int)
        self.lchild = lchild      # index into manager.trees, or None
        self.rchild = rchild
        self.parent = parent
        self.state = None         # (h, c) once computed


class TreeManager:
    def __init__(self, trees):
        self.trees = trees
        self.num_trees = len(trees)

    def get_tree(self, idx):
        return self.trees[idx]


# -----------------------------------------------------------------------------
# TreeEncoder with the hot path on TPU via Pallas
# -----------------------------------------------------------------------------
def _linear_params(key, in_f, out_f):
    # deterministic init mimicking nn.Linear's uniform(-1/sqrt(in), 1/sqrt(in))
    kw, kb = jax.random.split(key)
    bound = 1.0 / np.sqrt(in_f)
    W = jax.random.uniform(kw, (out_f, in_f), jnp.float32, -bound, bound)
    b = jax.random.uniform(kb, (out_f,), jnp.float32, -bound, bound)
    return W, b


class TreeEncoderPallas:
    def __init__(self, source_vocab_size, embedding_size, hidden_size,
                 batch_size, key):
        # The original module adds ix(embedding) to ilh(hidden); this only
        # type-checks when embedding_size == hidden_size.
        assert embedding_size == hidden_size
        self.source_vocab_size = source_vocab_size
        self.embedding_size = embedding_size
        self.hidden_size = hidden_size
        self.batch_size = batch_size

        H = hidden_size
        Hp = max(128, _round_up(H, 128))   # lane-aligned gate/feature width
        self.Hp = Hp
        # TODO(synk): for production H << 128, pack the 5 gates into
        # ceil(5H/128)*128 lanes instead of 5 full Hp blocks to cut padded-lane
        # matmul/EUP work (~2.5x at H=32); skipped for generality.

        keys = jax.random.split(key, 13)
        self.embedding = jax.random.normal(
            keys[0], (source_vocab_size, embedding_size), jnp.float32)
        # feature-padded bf16 embedding table (embeddings only feed the MXU)
        self.embedding_pad = jnp.zeros(
            (source_vocab_size, Hp), jnp.float32
        ).at[:, :H].set(self.embedding).astype(jnp.bfloat16)

        names = ["ix", "ilh", "irh", "fx", "flh", "frh",
                 "ox", "olh", "orh", "ux", "ulh", "urh"]
        self.p = {}
        for name, k in zip(names, keys[1:]):
            self.p[name] = _linear_params(k, H, H)

        def wt(name):  # [Hp, Hp] lane/row-padded transposed weight
            return jnp.zeros((Hp, Hp), jnp.float32).at[:H, :H].set(self.p[name][0].T)

        def bt(name):  # [Hp] lane-padded bias
            return jnp.zeros((Hp,), jnp.float32).at[:H].set(self.p[name][1])

        z = jnp.zeros((Hp, Hp), jnp.float32)
        # packed per-operand gate weights: cols = [i | o | u | fl | fr]
        self.Wx = jnp.concatenate(
            [wt("ix"), wt("ox"), wt("ux"), wt("fx"), wt("fx")], axis=1
        ).astype(jnp.bfloat16)
        self.Wl = jnp.concatenate(
            [wt("ilh"), wt("olh"), wt("ulh"), wt("flh"), z], axis=1
        ).astype(jnp.bfloat16)
        self.Wr = jnp.concatenate(
            [wt("irh"), wt("orh"), wt("urh"), z, wt("frh")], axis=1
        ).astype(jnp.bfloat16)
        # pre-summed biases (f32; gating math stays f32)
        self.b = jnp.concatenate([
            bt("ix") + bt("ilh") + bt("irh"),
            bt("ox") + bt("olh") + bt("orh"),
            bt("ux") + bt("ulh") + bt("urh"),
            bt("fx") + bt("flh"),
            bt("fx") + bt("frh")])[None, :]   # [1, 5*Hp]

    # --- Pallas-backed batched cell ------------------------------------------
    def calc_root(self, inputs, child_h, child_c):
        N = inputs.shape[0]
        return _calc_root_jit(inputs, child_h, child_c,
                              self.Wx, self.Wl, self.Wr, self.b,
                              n_pad=_bucket_rows(N), hp=self.Hp)

    def encode(self, encoder_inputs, children_h, children_c):
        embedding = jnp.take(self.embedding, encoder_inputs, axis=0)
        return self.calc_root(embedding, children_h, children_c)

    # --- forward: host-side wave scheduling + single fused device program ----
    # TODO(synk): the tree-traversal / wave-grouping logic is dynamic Python
    # control flow over tree objects; it has no Pallas equivalent and stays on
    # the host (it only touches tree structure, never device data).
    def forward(self, encoder_managers):
        H, Hp = self.hidden_size, self.Hp
        n_mgr = len(encoder_managers)

        offsets, total, max_num_trees = [], 0, 0
        for m in encoder_managers:
            offsets.append(total)
            total += m.num_trees
            max_num_trees = max(max_num_trees, m.num_trees)
        ZERO_ROW = 0            # all-zero sentinel (missing children / PAD), never written
        DUMP_ROW = total + 1    # scratch row for padded lanes of a wave, never read
        R = total + 2

        def row(m_idx, t_idx):
            return offsets[m_idx] + t_idx + 1

        computed = [[False] * m.num_trees for m in encoder_managers]

        def ready(m_idx, tree):
            if tree.lchild is not None and not computed[m_idx][tree.lchild]:
                return False
            if tree.rchild is not None and not computed[m_idx][tree.rchild]:
                return False
            return True

        def enqueue(queue, m_idx, idx, tree):
            l = ZERO_ROW if tree.lchild is None else row(m_idx, tree.lchild)
            r = ZERO_ROW if tree.rchild is None else row(m_idx, tree.rchild)
            queue.append((m_idx, idx, tree.root, l, r))

        # seed queue (same greedy bottom-up right-most rule as the original)
        queue, head, visited_idx = [], 0, []
        for m_idx, manager in enumerate(encoder_managers):
            idx = manager.num_trees - 1
            while idx >= 0:
                tree = manager.get_tree(idx)
                if ready(m_idx, tree):
                    enqueue(queue, m_idx, idx, tree)
                else:
                    break
                idx -= 1
            visited_idx.append(idx)

        # group into waves exactly like the original processing loop
        waves = []
        while head < len(queue):
            wave = []
            while head < len(queue):
                wave.append(queue[head])
                head += 1
            waves.append(wave)
            for (m_idx, idx, _, _, _) in wave:
                computed[m_idx][idx] = True
                tree = encoder_managers[m_idx].get_tree(idx)
                if tree.parent == visited_idx[m_idx]:
                    manager = encoder_managers[m_idx]
                    j = visited_idx[m_idx]
                    while j >= 0:
                        t = manager.get_tree(j)
                        if ready(m_idx, t):
                            enqueue(queue, m_idx, j, t)
                        else:
                            break
                        j -= 1
                    visited_idx[m_idx] = j

        # stack the whole schedule: all waves padded to one bucketed width so
        # the entire forest runs as a single jitted lax.scan dispatch
        n_waves = len(waves)
        h_buf = jnp.zeros((R, Hp), jnp.bfloat16)
        c_buf = jnp.zeros((R, Hp), jnp.float32)
        if n_waves > 0:
            pad_n = _bucket_rows(max(len(w) for w in waves))
            ids = np.zeros((n_waves, pad_n), np.int32)
            lidx = np.zeros((n_waves, pad_n), np.int32)
            ridx = np.zeros((n_waves, pad_n), np.int32)
            tgt = np.full((n_waves, pad_n), DUMP_ROW, np.int32)
            for w, wave in enumerate(waves):
                for k, (m_idx, idx, tok, l, r) in enumerate(wave):
                    ids[w, k], lidx[w, k], ridx[w, k] = tok, l, r
                    tgt[w, k] = row(m_idx, idx)
            h_buf, c_buf = _forward_waves(
                h_buf, c_buf, jnp.asarray(ids), jnp.asarray(lidx),
                jnp.asarray(ridx), jnp.asarray(tgt),
                self.embedding_pad, self.Wx, self.Wl, self.Wr, self.b)

        # assemble outputs with batched gathers (no per-node device glue)
        gather_rows = np.zeros((n_mgr, max_num_trees), np.int32)   # ZERO_ROW = PAD
        masks = np.ones((n_mgr, max_num_trees), np.uint8)
        root_rows = np.zeros((n_mgr,), np.int32)
        for m_idx, manager in enumerate(encoder_managers):
            for t_idx in range(manager.num_trees):
                gather_rows[m_idx, t_idx] = row(m_idx, t_idx)
                masks[m_idx, t_idx] = 0
            root_rows[m_idx] = row(m_idx, 0)

        h_nodes = h_buf[:, :H].astype(jnp.float32)
        c_nodes = c_buf[:, :H]
        init_encoder_outputs = jnp.take(
            h_nodes, jnp.asarray(gather_rows.reshape(-1)), axis=0
        ).reshape(n_mgr, max_num_trees, H)
        init_attention_masks = jnp.asarray(masks)
        root_h = jnp.take(h_nodes, jnp.asarray(root_rows), axis=0)
        root_c = jnp.take(c_nodes, jnp.asarray(root_rows), axis=0)
        encoder_h_state = [root_h[m] for m in range(n_mgr)]
        encoder_c_state = [root_c[m] for m in range(n_mgr)]

        # keep the original side effect of storing per-node states on the
        # trees; pull the state buffers to host ONCE (no per-node D2H slices)
        h_host = np.asarray(h_nodes)
        c_host = np.asarray(c_nodes)
        for m_idx, manager in enumerate(encoder_managers):
            for t_idx, tree in enumerate(manager.trees):
                g = row(m_idx, t_idx)
                tree.state = (h_host[g], c_host[g])

        return (init_encoder_outputs, init_attention_masks,
                encoder_h_state, encoder_c_state)


# -----------------------------------------------------------------------------
# Pure-JAX references (for kernel / scheduling verification)
# -----------------------------------------------------------------------------
def calc_root_ref(enc, x, child_h, child_c):
    def lin(name, v):
        W, b = enc.p[name]
        return v @ W.T + b

    hl, hr = child_h[:, 0], child_h[:, 1]
    i = jax.nn.sigmoid(lin("ix", x) + lin("ilh", hl) + lin("irh", hr))
    o = jax.nn.sigmoid(lin("ox", x) + lin("olh", hl) + lin("orh", hr))
    u = jnp.tanh(lin("ux", x) + lin("ulh", hl) + lin("urh", hr))
    fx = lin("fx", x)
    fl = jax.nn.sigmoid(fx + lin("flh", hl))
    fr = jax.nn.sigmoid(fx + lin("frh", hr))
    c = i * u + fl * child_c[:, 0] + fr * child_c[:, 1]
    h = o * jnp.tanh(c)
    return h, c


def forward_ref(enc, encoder_managers):
    H = enc.hidden_size
    zeros = jnp.zeros((H,), jnp.float32)
    max_num_trees = max(m.num_trees for m in encoder_managers)
    all_outputs, all_masks, h_states, c_states = [], [], [], []
    for manager in encoder_managers:
        states = [None] * manager.num_trees

        def compute(i, manager=manager, states=states):
            if states[i] is None:
                t = manager.get_tree(i)
                lh, lc = (zeros, zeros) if t.lchild is None else compute(t.lchild)
                rh, rc = (zeros, zeros) if t.rchild is None else compute(t.rchild)
                x = enc.embedding[t.root][None, :]
                ch = jnp.stack([lh, rh], axis=0)[None]
                cc = jnp.stack([lc, rc], axis=0)[None]
                h, c = calc_root_ref(enc, x, ch, cc)
                states[i] = (h[0], c[0])
            return states[i]

        for i in range(manager.num_trees):
            compute(i)
        h_states.append(states[0][0])
        c_states.append(states[0][1])
        outs = [states[i][0] for i in range(manager.num_trees)]
        mask = [0] * len(outs)
        if len(outs) < max_num_trees:
            pad_n = max_num_trees - len(outs)
            outs += [zeros] * pad_n
            mask += [1] * pad_n
        all_outputs.append(jnp.stack(outs, axis=0))
        all_masks.append(np.asarray(mask, np.uint8))
    return (jnp.stack(all_outputs, axis=0), np.stack(all_masks, axis=0),
            h_states, c_states)


if __name__ == "__main__":
    key = jax.random.PRNGKey(0)
    k_model, k_x, k_h, k_c = jax.random.split(key, 4)

    VOCAB, E, H, B = 16, 32, 32, 2
    enc = TreeEncoderPallas(VOCAB, E, H, B, k_model)

    # --- kernel vs pure-JAX reference on a random node batch -----------------
    N = 8
    ids = jax.random.randint(k_x, (N,), 0, VOCAB)
    emb = jnp.take(enc.embedding, ids, axis=0)
    child_h = jax.random.normal(k_h, (N, 2, H), jnp.float32)
    child_c = jax.random.normal(k_c, (N, 2, H), jnp.float32)
    h_k, c_k = enc.calc_root(emb, child_h, child_c)
    h_r, c_r = calc_root_ref(enc, emb, child_h, child_c)
    # bf16 matmul operands / bf16 h writeback with f32 accumulation
    np.testing.assert_allclose(np.asarray(h_k), np.asarray(h_r),
                               rtol=3e-2, atol=3e-2)
    np.testing.assert_allclose(np.asarray(c_k), np.asarray(c_r),
                               rtol=3e-2, atol=3e-2)

    # --- full forward over two small trees ------------------------------------
    manager0 = TreeManager([
        Tree(root=3, lchild=1, rchild=2, parent=None),
        Tree(root=5, lchild=3, rchild=4, parent=0),
        Tree(root=7, lchild=None, rchild=None, parent=0),
        Tree(root=2, lchild=None, rchild=None, parent=1),
        Tree(root=9, lchild=None, rchild=None, parent=1),
    ])
    manager1 = TreeManager([
        Tree(root=1, lchild=1, rchild=None, parent=None),
        Tree(root=4, lchild=None, rchild=2, parent=0),
        Tree(root=6, lchild=None, rchild=None, parent=1),
    ])

    outputs, masks, h_state, c_state = enc.forward([manager0, manager1])
    jax.block_until_ready(outputs)
    jax.block_until_ready(masks)
    jax.block_until_ready(h_state)
    jax.block_until_ready(c_state)

    assert outputs.shape == (2, 5, H)
    assert masks.shape == (2, 5) and masks.dtype == jnp.uint8
    assert len(h_state) == 2 and h_state[0].shape == (H,)

    # structural / scheduling check against a pure-JAX recursive reference
    ref_out, ref_masks, ref_h, ref_c = forward_ref(enc, [manager0, manager1])
    assert np.array_equal(np.asarray(masks), ref_masks)
    np.testing.assert_allclose(np.asarray(outputs), np.asarray(ref_out),
                               rtol=1e-1, atol=1e-1)
    for m in range(2):
        np.testing.assert_allclose(np.asarray(h_state[m]), np.asarray(ref_h[m]),
                                   rtol=1e-1, atol=1e-1)
        np.testing.assert_allclose(np.asarray(c_state[m]), np.asarray(ref_c[m]),
                                   rtol=1e-1, atol=1e-1)

    print("KERNEL_OK")
</pallas_src>

<mosaic_0001>
module attributes {stable_mosaic.version = 11 : i64} {
  func.func @tree_lstm_kernel(%arg0: i32, %arg1: memref<128x128xbf16, #tpu.memory_space<vmem>>, %arg2: memref<128x128xbf16, #tpu.memory_space<vmem>>, %arg3: memref<128x128xbf16, #tpu.memory_space<vmem>>, %arg4: memref<128x128xf32, #tpu.memory_space<vmem>>, %arg5: memref<128x128xf32, #tpu.memory_space<vmem>>, %arg6: memref<128x640xbf16, #tpu.memory_space<vmem>>, %arg7: memref<128x640xbf16, #tpu.memory_space<vmem>>, %arg8: memref<128x640xbf16, #tpu.memory_space<vmem>>, %arg9: memref<1x640xf32, #tpu.memory_space<vmem>>, %arg10: memref<128x128xbf16, #tpu.memory_space<vmem>>, %arg11: memref<128x128xf32, #tpu.memory_space<vmem>>) attributes {dimension_semantics = [#tpu.dimension_semantics<parallel>], iteration_bounds = array<i64: 1>, scalar_prefetch = 0 : i64, scratch_operands = 0 : i64, tpu.core_type = #tpu.core_type<tc>, window_params = [{transform_indices = @transform_0, window_bounds = array<i64: 128, 128>}, {transform_indices = @transform_1, window_bounds = array<i64: 128, 128>}, {transform_indices = @transform_2, window_bounds = array<i64: 128, 128>}, {transform_indices = @transform_3, window_bounds = array<i64: 128, 128>}, {transform_indices = @transform_4, window_bounds = array<i64: 128, 128>}, {pipeline_mode = #tpu.pipeline_mode<synchronous>, transform_indices = @transform_5, window_bounds = array<i64: 128, 640>}, {pipeline_mode = #tpu.pipeline_mode<synchronous>, transform_indices = @transform_6, window_bounds = array<i64: 128, 640>}, {pipeline_mode = #tpu.pipeline_mode<synchronous>, transform_indices = @transform_7, window_bounds = array<i64: 128, 640>}, {pipeline_mode = #tpu.pipeline_mode<synchronous>, transform_indices = @transform_8, window_bounds = array<i64: 1, 640>}, {transform_indices = @transform_9, window_bounds = array<i64: 128, 128>}, {transform_indices = @transform_10, window_bounds = array<i64: 128, 128>}]} {
    %c0 = arith.constant 0 : index
    %c0_0 = arith.constant 0 : index
    %0 = vector.load %arg1[%c0, %c0_0] : memref<128x128xbf16, #tpu.memory_space<vmem>>, vector<128x128xbf16>
    %c0_1 = arith.constant 0 : index
    %c0_2 = arith.constant 0 : index
    %1 = vector.load %arg6[%c0_1, %c0_2] : memref<128x640xbf16, #tpu.memory_space<vmem>>, vector<128x640xbf16>
    %cst = arith.constant dense<0.000000e+00> : vector<128x640xf32>
    %2 = tpu.matmul %0, %1, %cst {dimension_numbers = #tpu.dot_dimension_numbers<[1], [0], [0], [1], [0, 0, 1, 1], [], []>} : vector<128x128xbf16>, vector<128x640xbf16>, vector<128x640xf32> -> vector<128x640xf32>
    %c0_3 = arith.constant 0 : index
    %c0_4 = arith.constant 0 : index
    %3 = vector.load %arg2[%c0_3, %c0_4] : memref<128x128xbf16, #tpu.memory_space<vmem>>, vector<128x128xbf16>
    %c0_5 = arith.constant 0 : index
    %c0_6 = arith.constant 0 : index
    %4 = vector.load %arg7[%c0_5, %c0_6] : memref<128x640xbf16, #tpu.memory_space<vmem>>, vector<128x640xbf16>
    %cst_7 = arith.constant dense<0.000000e+00> : vector<128x640xf32>
    %5 = tpu.matmul %3, %4, %cst_7 {dimension_numbers = #tpu.dot_dimension_numbers<[1], [0], [0], [1], [0, 0, 1, 1], [], []>} : vector<128x128xbf16>, vector<128x640xbf16>, vector<128x640xf32> -> vector<128x640xf32>
    %6 = arith.addf %2, %5 : vector<128x640xf32>
    %c0_8 = arith.constant 0 : index
    %c0_9 = arith.constant 0 : index
    %7 = vector.load %arg3[%c0_8, %c0_9] : memref<128x128xbf16, #tpu.memory_space<vmem>>, vector<128x128xbf16>
    %c0_10 = arith.constant 0 : index
    %c0_11 = arith.constant 0 : index
    %8 = vector.load %arg8[%c0_10, %c0_11] : memref<128x640xbf16, #tpu.memory_space<vmem>>, vector<128x640xbf16>
    %cst_12 = arith.constant dense<0.000000e+00> : vector<128x640xf32>
    %9 = tpu.matmul %7, %8, %cst_12 {dimension_numbers = #tpu.dot_dimension_numbers<[1], [0], [0], [1], [0, 0, 1, 1], [], []>} : vector<128x128xbf16>, vector<128x640xbf16>, vector<128x640xf32> -> vector<128x640xf32>
    %10 = arith.addf %6, %9 : vector<128x640xf32>
    %c0_13 = arith.constant 0 : index
    %c0_14 = arith.constant 0 : index
    %11 = vector.load %arg9[%c0_13, %c0_14] : memref<1x640xf32, #tpu.memory_space<vmem>>, vector<1x640xf32>
    %12 = vector.broadcast %11 : vector<1x640xf32> to vector<128x640xf32>
    %13 = arith.addf %10, %12 : vector<128x640xf32>
    %14 = vector.extract_strided_slice %13 {offsets = [0, 0], sizes = [128, 128], strides = [1, 1]} : vector<128x640xf32> to vector<128x128xf32>
    %cst_15 = arith.constant 5.000000e-01 : f32
    %15 = vector.broadcast %cst_15 : f32 to vector<128x128xf32>
    %16 = arith.mulf %15, %14 : vector<128x128xf32>
    %17 = math.tanh %16 : vector<128x128xf32>
    %cst_16 = arith.constant 5.000000e-01 : f32
    %18 = vector.broadcast %cst_16 : f32 to vector<128x128xf32>
    %19 = arith.mulf %18, %17 : vector<128x128xf32>
    %cst_17 = arith.constant 5.000000e-01 : f32
    %20 = vector.broadcast %cst_17 : f32 to vector<128x128xf32>
    %21 = arith.addf %19, %20 : vector<128x128xf32>
    %22 = vector.extract_strided_slice %13 {offsets = [0, 128], sizes = [128, 128], strides = [1, 1]} : vector<128x640xf32> to vector<128x128xf32>
    %cst_18 = arith.constant 5.000000e-01 : f32
    %23 = vector.broadcast %cst_18 : f32 to vector<128x128xf32>
    %24 = arith.mulf %23, %22 : vector<128x128xf32>
    %25 = math.tanh %24 : vector<128x128xf32>
    %cst_19 = arith.constant 5.000000e-01 : f32
    %26 = vector.broadcast %cst_19 : f32 to vector<128x128xf32>
    %27 = arith.mulf %26, %25 : vector<128x128xf32>
    %cst_20 = arith.constant 5.000000e-01 : f32
    %28 = vector.broadcast %cst_20 : f32 to vector<128x128xf32>
    %29 = arith.addf %27, %28 : vector<128x128xf32>
    %30 = vector.extract_strided_slice %13 {offsets = [0, 256], sizes = [128, 128], strides = [1, 1]} : vector<128x640xf32> to vector<128x128xf32>
    %31 = math.tanh %30 : vector<128x128xf32>
    %32 = vector.extract_strided_slice %13 {offsets = [0, 384], sizes = [128, 128], strides = [1, 1]} : vector<128x640xf32> to vector<128x128xf32>
    %cst_21 = arith.constant 5.000000e-01 : f32
    %33 = vector.broadcast %cst_21 : f32 to vector<128x128xf32>
    %34 = arith.mulf %33, %32 : vector<128x128xf32>
    %35 = math.tanh %34 : vector<128x128xf32>
    %cst_22 = arith.constant 5.000000e-01 : f32
    %36 = vector.broadcast %cst_22 : f32 to vector<128x128xf32>
    %37 = arith.mulf %36, %35 : vector<128x128xf32>
    %cst_23 = arith.constant 5.000000e-01 : f32
    %38 = vector.broadcast %cst_23 : f32 to vector<128x128xf32>
    %39 = arith.addf %37, %38 : vector<128x128xf32>
    %40 = vector.extract_strided_slice %13 {offsets = [0, 512], sizes = [128, 128], strides = [1, 1]} : vector<128x640xf32> to vector<128x128xf32>
    %cst_24 = arith.constant 5.000000e-01 : f32
    %41 = vector.broadcast %cst_24 : f32 to vector<128x128xf32>
    %42 = arith.mulf %41, %40 : vector<128x128xf32>
    %43 = math.tanh %42 : vector<128x128xf32>
    %cst_25 = arith.constant 5.000000e-01 : f32
    %44 = vector.broadcast %cst_25 : f32 to vector<128x128xf32>
    %45 = arith.mulf %44, %43 : vector<128x128xf32>
    %cst_26 = arith.constant 5.000000e-01 : f32
    %46 = vector.broadcast %cst_26 : f32 to vector<128x128xf32>
    %47 = arith.addf %45, %46 : vector<128x128xf32>
    %48 = arith.mulf %21, %31 : vector<128x128xf32>
    %c0_27 = arith.constant 0 : index
    %c0_28 = arith.constant 0 : index
    %49 = vector.load %arg4[%c0_27, %c0_28] : memref<128x128xf32, #tpu.memory_space<vmem>>, vector<128x128xf32>
    %50 = arith.mulf %39, %49 : vector<128x128xf32>
    %51 = arith.addf %48, %50 : vector<128x128xf32>
    %c0_29 = arith.constant 0 : index
    %c0_30 = arith.constant 0 : index
    %52 = vector.load %arg5[%c0_29, %c0_30] : memref<128x128xf32, #tpu.memory_space<vmem>>, vector<128x128xf32>
    %53 = arith.mulf %47, %52 : vector<128x128xf32>
    %54 = arith.addf %51, %53 : vector<128x128xf32>
    %55 = math.tanh %54 : vector<128x128xf32>
    %56 = arith.mulf %29, %55 : vector<128x128xf32>
    %57 = arith.truncf %56 : vector<128x128xf32> to vector<128x128xbf16>
    %c0_31 = arith.constant 0 : index
    %c0_32 = arith.constant 0 : index
    %58 = vector.load %arg10[%c0_31, %c0_32] : memref<128x128xbf16, #tpu.memory_space<vmem>>, vector<128x128xbf16>
    tpu.vector_store %arg10[%c0_31, %c0_32], %57 {strides = array<i32>} : memref<128x128xbf16, #tpu.memory_space<vmem>>, vector<128x128xbf16>,
    %c0_33 = arith.constant 0 : index
    %c0_34 = arith.constant 0 : index
    %59 = vector.load %arg11[%c0_33, %c0_34] : memref<128x128xf32, #tpu.memory_space<vmem>>, vector<128x128xf32>
    tpu.vector_store %arg11[%c0_33, %c0_34], %54 {strides = array<i32>} : memref<128x128xf32, #tpu.memory_space<vmem>>, vector<128x128xf32>,
    return
  }
  func.func @transform_0(%arg0: i32) -> (i32, i32) {
    %c0_i32 = arith.constant 0 : i32
    %c0_i32_0 = arith.constant 0 : i32
    return %arg0, %c0_i32 : i32, i32
  }
  func.func @transform_1(%arg0: i32) -> (i32, i32) {
    %c0_i32 = arith.constant 0 : i32
    %c0_i32_0 = arith.constant 0 : i32
    return %arg0, %c0_i32 : i32, i32
  }
  func.func @transform_2(%arg0: i32) -> (i32, i32) {
    %c0_i32 = arith.constant 0 : i32
    %c0_i32_0 = arith.constant 0 : i32
    return %arg0, %c0_i32 : i32, i32
  }
  func.func @transform_3(%arg0: i32) -> (i32, i32) {
    %c0_i32 = arith.constant 0 : i32
    %c0_i32_0 = arith.constant 0 : i32
    return %arg0, %c0_i32 : i32, i32
  }
  func.func @transform_4(%arg0: i32) -> (i32, i32) {
    %c0_i32 = arith.constant 0 : i32
    %c0_i32_0 = arith.constant 0 : i32
    return %arg0, %c0_i32 : i32, i32
  }
  func.func @transform_5(%arg0: i32) -> (i32, i32) {
    %c0_i32 = arith.constant 0 : i32
    %c0_i32_0 = arith.constant 0 : i32
    %c0_i32_1 = arith.constant 0 : i32
    return %c0_i32, %c0_i32_0 : i32, i32
  }
  func.func @transform_6(%arg0: i32) -> (i32, i32) {
    %c0_i32 = arith.constant 0 : i32
    %c0_i32_0 = arith.constant 0 : i32
    %c0_i32_1 = arith.constant 0 : i32
    return %c0_i32, %c0_i32_0 : i32, i32
  }
  func.func @transform_7(%arg0: i32) -> (i32, i32) {
    %c0_i32 = arith.constant 0 : i32
    %c0_i32_0 = arith.constant 0 : i32
    %c0_i32_1 = arith.constant 0 : i32
    return %c0_i32, %c0_i32_0 : i32, i32
  }
  func.func @transform_8(%arg0: i32) -> (i32, i32) {
    %c0_i32 = arith.constant 0 : i32
    %c0_i32_0 = arith.constant 0 : i32
    %c0_i32_1 = arith.constant 0 : i32
    return %c0_i32, %c0_i32_0 : i32, i32
  }
  func.func @transform_9(%arg0: i32) -> (i32, i32) {
    %c0_i32 = arith.constant 0 : i32
    %c0_i32_0 = arith.constant 0 : i32
    return %arg0, %c0_i32 : i32, i32
  }
  func.func @transform_10(%arg0: i32) -> (i32, i32) {
    %c0_i32 = arith.constant 0 : i32
    %c0_i32_0 = arith.constant 0 : i32
    return %arg0, %c0_i32 : i32, i32
  }
}

</mosaic_0001>

<llo_original>
// kernel: _calc_root_jit.1
$region0: #{_calc_root_jit.1}
  #allocation0 [shape = 'u32[]', space=smem, size = 0x4, offset = 0x4, fixed_abs, tag = 'smem constant byte address 0x4 - core index']
  #allocation1 [shape = 'u32[144,128]{1,0:T(1,128)}', space=vmem, size = 0x12000, scoped, tag = 'internal scratch']
  %s0 = inlined_call_operand.vmem [shape: bf16[128,128], index: 0, kind: input, shape index: {}]
  %s1 = inlined_call_operand.vmem [shape: bf16[128,128], index: 1, kind: input, shape index: {}]
  %s2 = inlined_call_operand.vmem [shape: bf16[128,128], index: 2, kind: input, shape index: {}]
  %s3 = inlined_call_operand.vmem [shape: f32[128,128], index: 3, kind: input, shape index: {}]
  %s4 = inlined_call_operand.vmem [shape: f32[128,128], index: 4, kind: input, shape index: {}]
  %s5 = inlined_call_operand.vmem [shape: bf16[128,640], index: 5, kind: input, shape index: {}]
  %s6 = inlined_call_operand.hbm [shape: bf16[128,640], index: 6, kind: input, shape index: {}]
  %s7 = inlined_call_operand.hbm [shape: bf16[128,640], index: 7, kind: input, shape index: {}]
  %s8 = inlined_call_operand.vmem [shape: f32[1,640], index: 8, kind: input, shape index: {}]
  %s9 = inlined_call_operand.vmem [shape: bf16[128,128], index: 9, kind: output, shape index: {0}]
  %s10 = inlined_call_operand.vmem [shape: f32[128,128], index: 10, kind: output, shape index: {1}]
  %11 = xla_tuple %s9, %s10
  %s12 = sld [smem:[#allocation0]]
  $region62: #{_calc_root_jit.1} parent=0
    _
  %s14 = ssub.s32 1, %s12
  %s15 = scalar_select 0, %s14, %s12
  $region1: #{_calc_root_jit.1} parent=0
    #allocation2 [shape = 'u8[163840]{0}', space=vmem, size = 0x28000, scoped, tag = 'input window, operand 6, single buffered']
    #allocation3 [shape = 's32[1]{0}', space=sflag, size = 0x4, scoped, tag = 'scoped memory for _calc_root_jit.1']
    #allocation4 [shape = 'u8[163840]{0}', space=vmem, size = 0x28000, scoped, tag = 'input window, operand 7, single buffered']
    #allocation5 [shape = 's32[1]{0}', space=sflag, size = 0x4, scoped, tag = 'scoped memory for _calc_root_jit.1']
    %16 = vsyncpa [#allocation3], 0
    %17 = vsyncpa [#allocation5], 0
    // Predicated region
    $region2: #{_calc_root_jit.1} parent=1 // pred_check
      _
    $region3: #{_calc_root_jit.1} parent=1 // pred_check_branch
      %19 = sbr.rel (0) target = $region5
    $region4: #{_calc_root_jit.1} parent=1 // pred_region
      _
    $region5: #{_calc_root_jit.1} parent=1 // pred_fallthru
      _
    // Predicated region
    $region6: #{_calc_root_jit.1} parent=1 // pred_check
      _
    $region7: #{_calc_root_jit.1} parent=1 // pred_check_branch
      %21 = sbr.rel (0) target = $region9
    $region8: #{_calc_root_jit.1} parent=1 // pred_region
      _
    $region9: #{_calc_root_jit.1} parent=1 // pred_fallthru
      _
    // Predicated region
    $region10: #{_calc_root_jit.1} parent=1 // pred_check
      _
    $region11: #{_calc_root_jit.1} parent=1 // pred_check_branch
      %23 = sbr.rel (0) target = $region13
    $region12: #{_calc_root_jit.1} parent=1 // pred_region
      _
    $region13: #{_calc_root_jit.1} parent=1 // pred_fallthru
      _
    // Predicated region
    $region14: #{_calc_root_jit.1} parent=1 // pred_check
      _
    $region15: #{_calc_root_jit.1} parent=1 // pred_check_branch
      %25 = sbr.rel (0) target = $region17
    $region16: #{_calc_root_jit.1} parent=1 // pred_region
      _
    $region17: #{_calc_root_jit.1} parent=1 // pred_fallthru
      _
    // Predicated region
    $region18: #{_calc_root_jit.1} parent=1 // pred_check
      _
    $region19: #{_calc_root_jit.1} parent=1 // pred_check_branch
      %27 = sbr.rel (0) target = $region21
    $region20: #{_calc_root_jit.1} parent=1 // pred_region
      _
    $region21: #{_calc_root_jit.1} parent=1 // pred_fallthru
      _
    // Predicated region
    $region22: #{_calc_root_jit.1} parent=1 // pred_check
      _
    $region23: #{_calc_root_jit.1} parent=1 // pred_check_branch
      %29 = sbr.rel (0) target = $region25
    $region24: #{_calc_root_jit.1} parent=1 // pred_region
      _
    $region25: #{_calc_root_jit.1} parent=1 // pred_fallthru
      _
    // Predicated region
    $region26: #{_calc_root_jit.1} parent=1 // pred_check
      _
    $region27: #{_calc_root_jit.1} parent=1 // pred_check_branch
      %31 = sbr.rel (0) target = $region29
    $region28: #{_calc_root_jit.1} parent=1 // pred_region
      %s33 = ssub.s32 5120, 5120
      %34 = vsyncadd [#allocation3], %s33
      %s35 = sshll.u32 [#allocation2], 4
      %s36 = int_to_ptr.vmem [resolvable:$true] %s35
      %41 = dma.hbm_to_vmem [thread:$0]  %s6, 5120, %s36, [#allocation3], 320, 320, 20
    $region29: #{_calc_root_jit.1} parent=1 // pred_fallthru
      _
    // Predicated region
    $region30: #{_calc_root_jit.1} parent=1 // pred_check
      _
    $region31: #{_calc_root_jit.1} parent=1 // pred_check_branch
      %43 = sbr.rel (0) target = $region33
    $region32: #{_calc_root_jit.1} parent=1 // pred_region
      %s45 = ssub.s32 5120, 5120
      %46 = vsyncadd [#allocation5], %s45
      %s47 = sshll.u32 [#allocation4], 4
      %s48 = int_to_ptr.vmem [resolvable:$true] %s47
      %53 = dma.hbm_to_vmem [thread:$0]  %s7, 5120, %s48, [#allocation5], 320, 320, 20
    $region33: #{_calc_root_jit.1} parent=1 // pred_fallthru
      _
    // Predicated region
    $region34: #{_calc_root_jit.1} parent=1 // pred_check
      _
    $region35: #{_calc_root_jit.1} parent=1 // pred_check_branch
      %55 = sbr.rel (0) target = $region37
    $region36: #{_calc_root_jit.1} parent=1 // pred_region
      _
    $region37: #{_calc_root_jit.1} parent=1 // pred_fallthru
      _
    // Predicated region
    $region38: #{_calc_root_jit.1} parent=1 // pred_check
      _
    $region39: #{_calc_root_jit.1} parent=1 // pred_check_branch
      %57 = sbr.rel (0) target = $region41
    $region40: #{_calc_root_jit.1} parent=1 // pred_region
      %58 = dma.done [#allocation3], 5120
    $region41: #{_calc_root_jit.1} parent=1 // pred_fallthru
      _
    // Predicated region
    $region42: #{_calc_root_jit.1} parent=1 // pred_check
      _
    $region43: #{_calc_root_jit.1} parent=1 // pred_check_branch
      %60 = sbr.rel (0) target = $region45
    $region44: #{_calc_root_jit.1} parent=1 // pred_region
      %61 = dma.done [#allocation5], 5120
    $region45: #{_calc_root_jit.1} parent=1 // pred_fallthru
      _
    %v63 = vld [vmem:[%s0] sm:$0xf]
    %v64 = vld [vmem:[%s0 + $0x4] sm:$0xf]
    %v65 = vld [vmem:[%s0 + $0x8] sm:$0xf]
    %v66 = vld [vmem:[%s0 + $0xc] sm:$0xf]
    %v67 = vld [vmem:[%s0 + $0x10] sm:$0xf]
    %v68 = vld [vmem:[%s0 + $0x14] sm:$0xf]
    %v69 = vld [vmem:[%s0 + $0x18] sm:$0xf]
    %v70 = vld [vmem:[%s0 + $0x1c] sm:$0xf]
    %v71 = vld [vmem:[%s0 + $0x20] sm:$0xf]
    %v72 = vld [vmem:[%s0 + $0x24] sm:$0xf]
    %v73 = vld [vmem:[%s0 + $0x28] sm:$0xf]
    %v74 = vld [vmem:[%s0 + $0x2c] sm:$0xf]
    %v75 = vld [vmem:[%s0 + $0x30] sm:$0xf]
    %v76 = vld [vmem:[%s0 + $0x34] sm:$0xf]
    %v77 = vld [vmem:[%s0 + $0x38] sm:$0xf]
    %v78 = vld [vmem:[%s0 + $0x3c] sm:$0xf]
    %v79 = vld [vmem:[%s5] sm:$0xff]
    %v80 = vld [vmem:[%s5 + $0x8] sm:$0xff]
    %v81 = vld [vmem:[%s5 + $0x10] sm:$0xf]
    %v82 = vld [vmem:[%s5 + $0x14] sm:$0xff]
    %v83 = vld [vmem:[%s5 + $0x1c] sm:$0xff]
    %v84 = vld [vmem:[%s5 + $0x24] sm:$0xf]
    %v85 = vld [vmem:[%s5 + $0x28] sm:$0xff]
    %v86 = vld [vmem:[%s5 + $0x30] sm:$0xff]
    %v87 = vld [vmem:[%s5 + $0x38] sm:$0xf]
    %v88 = vld [vmem:[%s5 + $0x3c] sm:$0xff]
    %v89 = vld [vmem:[%s5 + $0x44] sm:$0xff]
    %v90 = vld [vmem:[%s5 + $0x4c] sm:$0xf]
    %v91 = vld [vmem:[%s5 + $0x50] sm:$0xff]
    %v92 = vld [vmem:[%s5 + $0x58] sm:$0xff]
    %v93 = vld [vmem:[%s5 + $0x60] sm:$0xf]
    %v94 = vld [vmem:[%s5 + $0x64] sm:$0xff]
    %v95 = vld [vmem:[%s5 + $0x6c] sm:$0xff]
    %v96 = vld [vmem:[%s5 + $0x74] sm:$0xf]
    %v97 = vld [vmem:[%s5 + $0x78] sm:$0xff]
    %v98 = vld [vmem:[%s5 + $0x80] sm:$0xff]
    %v99 = vld [vmem:[%s5 + $0x88] sm:$0xf]
    %v100 = vld [vmem:[%s5 + $0x8c] sm:$0xff]
    %v101 = vld [vmem:[%s5 + $0x94] sm:$0xff]
    %v102 = vld [vmem:[%s5 + $0x9c] sm:$0xf]
    %v103 = vld [vmem:[%s5 + $0xa0] sm:$0xff]
    %v104 = vld [vmem:[%s5 + $0xa8] sm:$0xff]
    %v105 = vld [vmem:[%s5 + $0xb0] sm:$0xf]
    %v106 = vld [vmem:[%s5 + $0xb4] sm:$0xff]
    %v107 = vld [vmem:[%s5 + $0xbc] sm:$0xff]
    %v108 = vld [vmem:[%s5 + $0xc4] sm:$0xf]
    %v109 = vld [vmem:[%s5 + $0xc8] sm:$0xff]
    %v110 = vld [vmem:[%s5 + $0xd0] sm:$0xff]
    %v111 = vld [vmem:[%s5 + $0xd8] sm:$0xf]
    %v112 = vld [vmem:[%s5 + $0xdc] sm:$0xff]
    %v113 = vld [vmem:[%s5 + $0xe4] sm:$0xff]
    %v114 = vld [vmem:[%s5 + $0xec] sm:$0xf]
    %v115 = vld [vmem:[%s5 + $0xf0] sm:$0xff]
    %v116 = vld [vmem:[%s5 + $0xf8] sm:$0xff]
    %v117 = vld [vmem:[%s5 + $0x100] sm:$0xf]
    %v118 = vld [vmem:[%s5 + $0x104] sm:$0xff]
    %v119 = vld [vmem:[%s5 + $0x10c] sm:$0xff]
    %v120 = vld [vmem:[%s5 + $0x114] sm:$0xf]
    %v121 = vld [vmem:[%s5 + $0x118] sm:$0xff]
    %v122 = vld [vmem:[%s5 + $0x120] sm:$0xff]
    %v123 = vld [vmem:[%s5 + $0x128] sm:$0xf]
    %v124 = vld [vmem:[%s5 + $0x12c] sm:$0xff]
    %v125 = vld [vmem:[%s5 + $0x134] sm:$0xff]
    %v126 = vld [vmem:[%s5 + $0x13c] sm:$0xf]
    %v127 = vld [vmem:[%s1] sm:$0xf]
    %v128 = vld [vmem:[%s1 + $0x4] sm:$0xf]
    %v129 = vld [vmem:[%s1 + $0x8] sm:$0xf]
    %v130 = vld [vmem:[%s1 + $0xc] sm:$0xf]
    %v131 = vld [vmem:[%s1 + $0x10] sm:$0xf]
    %v132 = vld [vmem:[%s1 + $0x14] sm:$0xf]
    %v133 = vld [vmem:[%s1 + $0x18] sm:$0xf]
    %v134 = vld [vmem:[%s1 + $0x1c] sm:$0xf]
    %v135 = vld [vmem:[%s1 + $0x20] sm:$0xf]
    %v136 = vld [vmem:[%s1 + $0x24] sm:$0xf]
    %v137 = vld [vmem:[%s1 + $0x28] sm:$0xf]
    %v138 = vld [vmem:[%s1 + $0x2c] sm:$0xf]
    %v139 = vld [vmem:[%s1 + $0x30] sm:$0xf]
    %v140 = vld [vmem:[%s1 + $0x34] sm:$0xf]
    %v141 = vld [vmem:[%s1 + $0x38] sm:$0xf]
    %v142 = vld [vmem:[%s1 + $0x3c] sm:$0xf]
    %v143 = vld [vmem:[#allocation2] sm:$0xff]
    %v144 = vld [vmem:[#allocation2 + $0x8] sm:$0xff]
    %v145 = vld [vmem:[#allocation2 + $0x10] sm:$0xf]
    %v146 = vld [vmem:[#allocation2 + $0x14] sm:$0xff]
    %v147 = vld [vmem:[#allocation2 + $0x1c] sm:$0xff]
    %v148 = vld [vmem:[#allocation2 + $0x24] sm:$0xf]
    %v149 = vld [vmem:[#allocation2 + $0x28] sm:$0xff]
    %v150 = vld [vmem:[#allocation2 + $0x30] sm:$0xff]
    %v151 = vld [vmem:[#allocation2 + $0x38] sm:$0xf]
    %v152 = vld [vmem:[#allocation2 + $0x3c] sm:$0xff]
    %v153 = vld [vmem:[#allocation2 + $0x44] sm:$0xff]
    %v154 = vld [vmem:[#allocation2 + $0x4c] sm:$0xf]
    %v155 = vld [vmem:[#allocation2 + $0x50] sm:$0xff]
    %v156 = vld [vmem:[#allocation2 + $0x58] sm:$0xff]
    %v157 = vld [vmem:[#allocation2 + $0x60] sm:$0xf]
    %v158 = vld [vmem:[#allocation2 + $0x64] sm:$0xff]
    %v159 = vld [vmem:[#allocation2 + $0x6c] sm:$0xff]
    %v160 = vld [vmem:[#allocation2 + $0x74] sm:$0xf]
    %v161 = vld [vmem:[#allocation2 + $0x78] sm:$0xff]
    %v162 = vld [vmem:[#allocation2 + $0x80] sm:$0xff]
    %v163 = vld [vmem:[#allocation2 + $0x88] sm:$0xf]
    %v164 = vld [vmem:[#allocation2 + $0x8c] sm:$0xff]
    %v165 = vld [vmem:[#allocation2 + $0x94] sm:$0xff]
    %v166 = vld [vmem:[#allocation2 + $0x9c] sm:$0xf]
    %v167 = vld [vmem:[#allocation2 + $0xa0] sm:$0xff]
    %v168 = vld [vmem:[#allocation2 + $0xa8] sm:$0xff]
    %v169 = vld [vmem:[#allocation2 + $0xb0] sm:$0xf]
    %v170 = vld [vmem:[#allocation2 + $0xb4] sm:$0xff]
    %v171 = vld [vmem:[#allocation2 + $0xbc] sm:$0xff]
    %v172 = vld [vmem:[#allocation2 + $0xc4] sm:$0xf]
    %v173 = vld [vmem:[#allocation2 + $0xc8] sm:$0xff]
    %v174 = vld [vmem:[#allocation2 + $0xd0] sm:$0xff]
    %v175 = vld [vmem:[#allocation2 + $0xd8] sm:$0xf]
    %v176 = vld [vmem:[#allocation2 + $0xdc] sm:$0xff]
    %v177 = vld [vmem:[#allocation2 + $0xe4] sm:$0xff]
    %v178 = vld [vmem:[#allocation2 + $0xec] sm:$0xf]
    %v179 = vld [vmem:[#allocation2 + $0xf0] sm:$0xff]
    %v180 = vld [vmem:[#allocation2 + $0xf8] sm:$0xff]
    %v181 = vld [vmem:[#allocation2 + $0x100] sm:$0xf]
    %v182 = vld [vmem:[#allocation2 + $0x104] sm:$0xff]
    %v183 = vld [vmem:[#allocation2 + $0x10c] sm:$0xff]
    %v184 = vld [vmem:[#allocation2 + $0x114] sm:$0xf]
    %v185 = vld [vmem:[#allocation2 + $0x118] sm:$0xff]
    %v186 = vld [vmem:[#allocation2 + $0x120] sm:$0xff]
    %v187 = vld [vmem:[#allocation2 + $0x128] sm:$0xf]
    %v188 = vld [vmem:[#allocation2 + $0x12c] sm:$0xff]
    %v189 = vld [vmem:[#allocation2 + $0x134] sm:$0xff]
    %v190 = vld [vmem:[#allocation2 + $0x13c] sm:$0xf]
    %v207 = vunpack.c.l.b16 %v127
    %v208 = vunpack.c.l.b16 %v128
    %v209 = vunpack.c.l.b16 %v129
    %v210 = vunpack.c.l.b16 %v130
    %v211 = vunpack.c.l.b16 %v131
    %v212 = vunpack.c.l.b16 %v132
    %v213 = vunpack.c.l.b16 %v133
    %v214 = vunpack.c.l.b16 %v134
    %v215 = vunpack.c.l.b16 %v135
    %v216 = vunpack.c.l.b16 %v136
    %v217 = vunpack.c.l.b16 %v137
    %v218 = vunpack.c.l.b16 %v138
    %v219 = vunpack.c.l.b16 %v139
    %v220 = vunpack.c.l.b16 %v140
    %v221 = vunpack.c.l.b16 %v141
    %v222 = vunpack.c.l.b16 %v142
    %v223 = vpack.c.b16 %v208, %v207
    %v224 = vpack.c.b16 %v210, %v209
    %v225 = vpack.c.b16 %v212, %v211
    %v226 = vpack.c.b16 %v214, %v213
    %v227 = vpack.c.b16 %v216, %v215
    %v228 = vpack.c.b16 %v218, %v217
    %v229 = vpack.c.b16 %v220, %v219
    %v230 = vpack.c.b16 %v222, %v221
    %v287 = vunpack.c.l.b16 %v143
    %v288 = vunpack.c.h.b16 %v143
    %v289 = vunpack.c.l.b16 %v144
    %v290 = vunpack.c.h.b16 %v144
    %v291 = vunpack.c.l.b16 %v145
    %v292 = vunpack.c.l.b16 %v146
    %v293 = vunpack.c.h.b16 %v146
    %v294 = vunpack.c.l.b16 %v147
    %v295 = vunpack.c.h.b16 %v147
    %v296 = vunpack.c.l.b16 %v148
    %v297 = vunpack.c.l.b16 %v149
    %v298 = vunpack.c.h.b16 %v149
    %v299 = vunpack.c.l.b16 %v150
    %v300 = vunpack.c.h.b16 %v150
    %v301 = vunpack.c.l.b16 %v151
    %v302 = vunpack.c.l.b16 %v152
    %v303 = vunpack.c.h.b16 %v152
    %v304 = vunpack.c.l.b16 %v153
    %v305 = vunpack.c.h.b16 %v153
    %v306 = vunpack.c.l.b16 %v154
    %v307 = vunpack.c.l.b16 %v155
    %v308 = vunpack.c.h.b16 %v155
    %v309 = vunpack.c.l.b16 %v156
    %v310 = vunpack.c.h.b16 %v156
    %v311 = vunpack.c.l.b16 %v157
    %v312 = vunpack.c.l.b16 %v158
    %v313 = vunpack.c.h.b16 %v158
    %v314 = vunpack.c.l.b16 %v159
    %v315 = vunpack.c.h.b16 %v159
    %v316 = vunpack.c.l.b16 %v160
    %v317 = vunpack.c.l.b16 %v161
    %v318 = vunpack.c.h.b16 %v161
    %v319 = vunpack.c.l.b16 %v162
    %v320 = vunpack.c.h.b16 %v162
    %v321 = vunpack.c.l.b16 %v163
    %v322 = vunpack.c.l.b16 %v164
    %v323 = vunpack.c.h.b16 %v164
    %v324 = vunpack.c.l.b16 %v165
    %v325 = vunpack.c.h.b16 %v165
    %v326 = vunpack.c.l.b16 %v166
    %v327 = vunpack.c.l.b16 %v167
    %v328 = vunpack.c.h.b16 %v167
    %v329 = vunpack.c.l.b16 %v168
    %v330 = vunpack.c.h.b16 %v168
    %v331 = vunpack.c.l.b16 %v169
    %v332 = vunpack.c.l.b16 %v170
    %v333 = vunpack.c.h.b16 %v170
    %v334 = vunpack.c.l.b16 %v171
    %v335 = vunpack.c.h.b16 %v171
    %v336 = vunpack.c.l.b16 %v172
    %v337 = vunpack.c.l.b16 %v173
    %v338 = vunpack.c.h.b16 %v173
    %v339 = vunpack.c.l.b16 %v174
    %v340 = vunpack.c.h.b16 %v174
    %v341 = vunpack.c.l.b16 %v175
    %v342 = vunpack.c.l.b16 %v176
    %v343 = vunpack.c.h.b16 %v176
    %v344 = vunpack.c.l.b16 %v177
    %v345 = vunpack.c.h.b16 %v177
    %v346 = vunpack.c.l.b16 %v178
    %v347 = vunpack.c.l.b16 %v179
    %v348 = vunpack.c.h.b16 %v179
    %v349 = vunpack.c.l.b16 %v180
    %v350 = vunpack.c.h.b16 %v180
    %v351 = vunpack.c.l.b16 %v181
    %v352 = vunpack.c.l.b16 %v182
    %v353 = vunpack.c.h.b16 %v182
    %v354 = vunpack.c.l.b16 %v183
    %v355 = vunpack.c.h.b16 %v183
    %v356 = vunpack.c.l.b16 %v184
    %v357 = vunpack.c.l.b16 %v185
    %v358 = vunpack.c.h.b16 %v185
    %v359 = vunpack.c.l.b16 %v186
    %v360 = vunpack.c.h.b16 %v186
    %v361 = vunpack.c.l.b16 %v187
    %v362 = vunpack.c.l.b16 %v188
    %v363 = vunpack.c.h.b16 %v188
    %v364 = vunpack.c.l.b16 %v189
    %v365 = vunpack.c.h.b16 %v189
    %v366 = vunpack.c.l.b16 %v190
    %v367 = vpack.c.b16 %v292, %v287
    %v368 = vpack.c.b16 %v293, %v288
    %v369 = vpack.c.b16 %v294, %v289
    %v370 = vpack.c.b16 %v295, %v290
    %v371 = vpack.c.b16 %v296, %v291
    %v372 = vpack.c.b16 %v302, %v297
    %v373 = vpack.c.b16 %v303, %v298
    %v374 = vpack.c.b16 %v304, %v299
    %v375 = vpack.c.b16 %v305, %v300
    %v376 = vpack.c.b16 %v306, %v301
    %v377 = vpack.c.b16 %v312, %v307
    %v378 = vpack.c.b16 %v313, %v308
    %v379 = vpack.c.b16 %v314, %v309
    %v380 = vpack.c.b16 %v315, %v310
    %v381 = vpack.c.b16 %v316, %v311
    %v382 = vpack.c.b16 %v322, %v317
    %v383 = vpack.c.b16 %v323, %v318
    %v384 = vpack.c.b16 %v324, %v319
    %v385 = vpack.c.b16 %v325, %v320
    %v386 = vpack.c.b16 %v326, %v321
    %v387 = vpack.c.b16 %v332, %v327
    %v388 = vpack.c.b16 %v333, %v328
    %v389 = vpack.c.b16 %v334, %v329
    %v390 = vpack.c.b16 %v335, %v330
    %v391 = vpack.c.b16 %v336, %v331
    %v392 = vpack.c.b16 %v342, %v337
    %v393 = vpack.c.b16 %v343, %v338
    %v394 = vpack.c.b16 %v344, %v339
    %v395 = vpack.c.b16 %v345, %v340
    %v396 = vpack.c.b16 %v346, %v341
    %v397 = vpack.c.b16 %v352, %v347
    %v398 = vpack.c.b16 %v353, %v348
    %v399 = vpack.c.b16 %v354, %v349
    %v400 = vpack.c.b16 %v355, %v350
    %v401 = vpack.c.b16 %v356, %v351
    %v402 = vpack.c.b16 %v362, %v357
    %v403 = vpack.c.b16 %v363, %v358
    %v404 = vpack.c.b16 %v364, %v359
    %v405 = vpack.c.b16 %v365, %v360
    %v406 = vpack.c.b16 %v366, %v361
    %447 = vmatprep.subr.bf16.mxu0 %v368
    %448 = vmatpush1.bf16.msra.mxu0 %v367
    %449 = vmatprep.subr.bf16.mxu0 %v373
    %450 = vmatpush1.bf16.msra.mxu0 %v372
    %451 = vmatprep.subr.bf16.mxu0 %v378
    %452 = vmatpush1.bf16.msra.mxu0 %v377
    %453 = vmatprep.subr.bf16.mxu0 %v383
    %454 = vmatpush1.bf16.msra.mxu0 %v382
    %455 = vmatprep.subr.bf16.mxu0 %v388
    %456 = vmatpush1.bf16.msra.mxu0 %v387
    %457 = vmatprep.subr.bf16.mxu0 %v393
    %458 = vmatpush1.bf16.msra.mxu0 %v392
    %459 = vmatprep.subr.bf16.mxu0 %v398
    %460 = vmatpush1.bf16.msra.mxu0 %v397
    %461 = vmatprep.subr.bf16.mxu0 %v403
    %462 = vmatpush1.bf16.msra.mxu0 %v402
    %463 = vmatprep.subr.bf16.mxu0 0
    %464 = vmatpush1.bf16.msra.mxu0 0
    %465 = vmatprep.subr.bf16.mxu0 0
    %466 = vmatpush1.bf16.msra.mxu0 0
    %467 = vmatprep.subr.bf16.mxu0 0
    %468 = vmatpush1.bf16.msra.mxu0 0
    %469 = vmatprep.subr.bf16.mxu0 0
    %470 = vmatpush1.bf16.msra.mxu0 0
    %471 = vmatprep.subr.bf16.mxu0 0
    %472 = vmatpush1.bf16.msra.mxu0 0
    %473 = vmatprep.subr.bf16.mxu0 0
    %474 = vmatpush1.bf16.msra.mxu0 0
    %475 = vmatprep.subr.bf16.mxu0 0
    %476 = vmatpush1.bf16.msra.mxu0 0
    %477 = vmatprep.subr.bf16.mxu0 0
    %478 = vmatpush1.bf16.msra.mxu0 0
    %479 = vmatprep.mubr.bf16.mxu0 0
    %480 = vmatmul.mubr.bf16.gmra.mrb[0].mxu0 %v223
    %v481 = vpop.f32.mrb[0].mxu0
    %v482 = vadd.f32 0.0, %v481
    %v483 = vpop.f32.mrb[0].mxu0
    %v484 = vadd.f32 0.0, %v483
    %v485 = vpop.f32.mrb[0].mxu0
    %v486 = vadd.f32 0.0, %v485
    %v487 = vpop.f32.mrb[0].mxu0
    %v488 = vadd.f32 0.0, %v487
    %489 = vmatprep.mubr.bf16.mxu0 0
    %490 = vmatmul.mubr.bf16.gmra.mrb[0].mxu0 %v224
    %v491 = vpop.f32.mrb[0].mxu0
    %v492 = vadd.f32 0.0, %v491
    %v493 = vpop.f32.mrb[0].mxu0
    %v494 = vadd.f32 0.0, %v493
    %v495 = vpop.f32.mrb[0].mxu0
    %v496 = vadd.f32 0.0, %v495
    %v497 = vpop.f32.mrb[0].mxu0
    %v498 = vadd.f32 0.0, %v497
    %499 = vmatprep.mubr.bf16.mxu0 0
    %500 = vmatmul.mubr.bf16.gmra.mrb[0].mxu0 %v225
    %v501 = vpop.f32.mrb[0].mxu0
    %v502 = vadd.f32 0.0, %v501
    %v503 = vpop.f32.mrb[0].mxu0
    %v504 = vadd.f32 0.0, %v503
    %v505 = vpop.f32.mrb[0].mxu0
    %v506 = vadd.f32 0.0, %v505
    %v507 = vpop.f32.mrb[0].mxu0
    %v508 = vadd.f32 0.0, %v507
    %509 = vmatprep.mubr.bf16.mxu0 0
    %510 = vmatmul.mubr.bf16.gmra.mrb[0].mxu0 %v226
    %v511 = vpop.f32.mrb[0].mxu0
    %v512 = vadd.f32 0.0, %v511
    %v513 = vpop.f32.mrb[0].mxu0
    %v514 = vadd.f32 0.0, %v513
    %v515 = vpop.f32.mrb[0].mxu0
    %v516 = vadd.f32 0.0, %v515
    %v517 = vpop.f32.mrb[0].mxu0
    %v518 = vadd.f32 0.0, %v517
    %519 = vmatprep.mubr.bf16.mxu0 0
    %520 = vmatmul.mubr.bf16.gmra.mrb[0].mxu0 %v227
    %v521 = vpop.f32.mrb[0].mxu0
    %v522 = vadd.f32 0.0, %v521
    %v523 = vpop.f32.mrb[0].mxu0
    %v524 = vadd.f32 0.0, %v523
    %v525 = vpop.f32.mrb[0].mxu0
    %v526 = vadd.f32 0.0, %v525
    %v527 = vpop.f32.mrb[0].mxu0
    %v528 = vadd.f32 0.0, %v527
    %529 = vmatprep.mubr.bf16.mxu0 0
    %530 = vmatmul.mubr.bf16.gmra.mrb[0].mxu0 %v228
    %v531 = vpop.f32.mrb[0].mxu0
    %v532 = vadd.f32 0.0, %v531
    %v533 = vpop.f32.mrb[0].mxu0
    %v534 = vadd.f32 0.0, %v533
    %v535 = vpop.f32.mrb[0].mxu0
    %v536 = vadd.f32 0.0, %v535
    %v537 = vpop.f32.mrb[0].mxu0
    %v538 = vadd.f32 0.0, %v537
    %539 = vmatprep.mubr.bf16.mxu0 0
    %540 = vmatmul.mubr.bf16.gmra.mrb[0].mxu0 %v229
    %v541 = vpop.f32.mrb[0].mxu0
    %v542 = vadd.f32 0.0, %v541
    %v543 = vpop.f32.mrb[0].mxu0
    %v544 = vadd.f32 0.0, %v543
    %v545 = vpop.f32.mrb[0].mxu0
    %v546 = vadd.f32 0.0, %v545
    %v547 = vpop.f32.mrb[0].mxu0
    %v548 = vadd.f32 0.0, %v547
    %549 = vmatprep.mubr.bf16.mxu0 0
    %550 = vmatmul.mubr.bf16.gmra.mrb[0].mxu0 %v230
    %v551 = vpop.f32.mrb[0].mxu0
    %v552 = vadd.f32 0.0, %v551
    %v553 = vpop.f32.mrb[0].mxu0
    %v554 = vadd.f32 0.0, %v553
    %v555 = vpop.f32.mrb[0].mxu0
    %v556 = vadd.f32 0.0, %v555
    %v557 = vpop.f32.mrb[0].mxu0
    %v558 = vadd.f32 0.0, %v557
    %559 = vdwg.mxu0
    %560 = vmatprep.subr.bf16.mxu0 %v370
    %561 = vmatpush1.bf16.msra.mxu0 %v369
    %562 = vmatprep.subr.bf16.mxu0 %v375
    %563 = vmatpush1.bf16.msra.mxu0 %v374
    %564 = vmatprep.subr.bf16.mxu0 %v380
    %565 = vmatpush1.bf16.msra.mxu0 %v379
    %566 = vmatprep.subr.bf16.mxu0 %v385
    %567 = vmatpush1.bf16.msra.mxu0 %v384
    %568 = vmatprep.subr.bf16.mxu0 %v390
    %569 = vmatpush1.bf16.msra.mxu0 %v389
    %570 = vmatprep.subr.bf16.mxu0 %v395
    %571 = vmatpush1.bf16.msra.mxu0 %v394
    %572 = vmatprep.subr.bf16.mxu0 %v400
    %573 = vmatpush1.bf16.msra.mxu0 %v399
    %574 = vmatprep.subr.bf16.mxu0 %v405
    %575 = vmatpush1.bf16.msra.mxu0 %v404
    %576 = vmatprep.subr.bf16.mxu0 0
    %577 = vmatpush1.bf16.msra.mxu0 0
    %578 = vmatprep.subr.bf16.mxu0 0
    %579 = vmatpush1.bf16.msra.mxu0 0
    %580 = vmatprep.subr.bf16.mxu0 0
    %581 = vmatpush1.bf16.msra.mxu0 0
    %582 = vmatprep.subr.bf16.mxu0 0
    %583 = vmatpush1.bf16.msra.mxu0 0
    %584 = vmatprep.subr.bf16.mxu0 0
    %585 = vmatpush1.bf16.msra.mxu0 0
    %586 = vmatprep.subr.bf16.mxu0 0
    %587 = vmatpush1.bf16.msra.mxu0 0
    %588 = vmatprep.subr.bf16.mxu0 0
    %589 = vmatpush1.bf16.msra.mxu0 0
    %590 = vmatprep.subr.bf16.mxu0 0
    %591 = vmatpush1.bf16.msra.mxu0 0
    %592 = vmatprep.mubr.bf16.mxu0 0
    %593 = vmatmul.mubr.bf16.gmra.mrb[0].mxu0 %v223
    %v594 = vpop.f32.mrb[0].mxu0
    %v595 = vadd.f32 0.0, %v594
    %v596 = vpop.f32.mrb[0].mxu0
    %v597 = vadd.f32 0.0, %v596
    %v598 = vpop.f32.mrb[0].mxu0
    %v599 = vadd.f32 0.0, %v598
    %v600 = vpop.f32.mrb[0].mxu0
    %v601 = vadd.f32 0.0, %v600
    %602 = vmatprep.mubr.bf16.mxu0 0
    %603 = vmatmul.mubr.bf16.gmra.mrb[0].mxu0 %v224
    %v604 = vpop.f32.mrb[0].mxu0
    %v605 = vadd.f32 0.0, %v604
    %v606 = vpop.f32.mrb[0].mxu0
    %v607 = vadd.f32 0.0, %v606
    %v608 = vpop.f32.mrb[0].mxu0
    %v609 = vadd.f32 0.0, %v608
    %v610 = vpop.f32.mrb[0].mxu0
    %v611 = vadd.f32 0.0, %v610
    %612 = vmatprep.mubr.bf16.mxu0 0
    %613 = vmatmul.mubr.bf16.gmra.mrb[0].mxu0 %v225
    %v614 = vpop.f32.mrb[0].mxu0
    %v615 = vadd.f32 0.0, %v614
    %v616 = vpop.f32.mrb[0].mxu0
    %v617 = vadd.f32 0.0, %v616
    %v618 = vpop.f32.mrb[0].mxu0
    %v619 = vadd.f32 0.0, %v618
    %v620 = vpop.f32.mrb[0].mxu0
    %v621 = vadd.f32 0.0, %v620
    %622 = vmatprep.mubr.bf16.mxu0 0
    %623 = vmatmul.mubr.bf16.gmra.mrb[0].mxu0 %v226
    %v624 = vpop.f32.mrb[0].mxu0
    %v625 = vadd.f32 0.0, %v624
    %v626 = vpop.f32.mrb[0].mxu0
    %v627 = vadd.f32 0.0, %v626
    %v628 = vpop.f32.mrb[0].mxu0
    %v629 = vadd.f32 0.0, %v628
    %v630 = vpop.f32.mrb[0].mxu0
    %v631 = vadd.f32 0.0, %v630
    %632 = vmatprep.mubr.bf16.mxu0 0
    %633 = vmatmul.mubr.bf16.gmra.mrb[0].mxu0 %v227
    %v634 = vpop.f32.mrb[0].mxu0
    %v635 = vadd.f32 0.0, %v634
    %v636 = vpop.f32.mrb[0].mxu0
    %v637 = vadd.f32 0.0, %v636
    %v638 = vpop.f32.mrb[0].mxu0
    %v639 = vadd.f32 0.0, %v638
    %v640 = vpop.f32.mrb[0].mxu0
    %v641 = vadd.f32 0.0, %v640
    %642 = vmatprep.mubr.bf16.mxu0 0
    %643 = vmatmul.mubr.bf16.gmra.mrb[0].mxu0 %v228
    %v644 = vpop.f32.mrb[0].mxu0
    %v645 = vadd.f32 0.0, %v644
    %v646 = vpop.f32.mrb[0].mxu0
    %v647 = vadd.f32 0.0, %v646
    %v648 = vpop.f32.mrb[0].mxu0
    %v649 = vadd.f32 0.0, %v648
    %v650 = vpop.f32.mrb[0].mxu0
    %v651 = vadd.f32 0.0, %v650
    %652 = vmatprep.mubr.bf16.mxu0 0
    %653 = vmatmul.mubr.bf16.gmra.mrb[0].mxu0 %v229
    %v654 = vpop.f32.mrb[0].mxu0
    %v655 = vadd.f32 0.0, %v654
    %v656 = vpop.f32.mrb[0].mxu0
    %v657 = vadd.f32 0.0, %v656
    %v658 = vpop.f32.mrb[0].mxu0
    %v659 = vadd.f32 0.0, %v658
    %v660 = vpop.f32.mrb[0].mxu0
    %v661 = vadd.f32 0.0, %v660
    %662 = vmatprep.mubr.bf16.mxu0 0
    %663 = vmatmul.mubr.bf16.gmra.mrb[0].mxu0 %v230
    %v664 = vpop.f32.mrb[0].mxu0
    %v665 = vadd.f32 0.0, %v664
    %v666 = vpop.f32.mrb[0].mxu0
    %v667 = vadd.f32 0.0, %v666
    %v668 = vpop.f32.mrb[0].mxu0
    %v669 = vadd.f32 0.0, %v668
    %v670 = vpop.f32.mrb[0].mxu0
    %v671 = vadd.f32 0.0, %v670
    %672 = vdwg.mxu0
    %673 = vmatprep.subr.bf16.mxu0 0
    %674 = vmatpush1.bf16.msra.mxu0 %v371
    %675 = vmatprep.subr.bf16.mxu0 0
    %676 = vmatpush1.bf16.msra.mxu0 %v376
    %677 = vmatprep.subr.bf16.mxu0 0
    %678 = vmatpush1.bf16.msra.mxu0 %v381
    %679 = vmatprep.subr.bf16.mxu0 0
    %680 = vmatpush1.bf16.msra.mxu0 %v386
    %681 = vmatprep.subr.bf16.mxu0 0
    %682 = vmatpush1.bf16.msra.mxu0 %v391
    %683 = vmatprep.subr.bf16.mxu0 0
    %684 = vmatpush1.bf16.msra.mxu0 %v396
    %685 = vmatprep.subr.bf16.mxu0 0
    %686 = vmatpush1.bf16.msra.mxu0 %v401
    %687 = vmatprep.subr.bf16.mxu0 0
    %688 = vmatpush1.bf16.msra.mxu0 %v406
    %689 = vmatprep.subr.bf16.mxu0 0
    %690 = vmatpush1.bf16.msra.mxu0 0
    %691 = vmatprep.subr.bf16.mxu0 0
    %692 = vmatpush1.bf16.msra.mxu0 0
    %693 = vmatprep.subr.bf16.mxu0 0
    %694 = vmatpush1.bf16.msra.mxu0 0
    %695 = vmatprep.subr.bf16.mxu0 0
    %696 = vmatpush1.bf16.msra.mxu0 0
    %697 = vmatprep.subr.bf16.mxu0 0
    %698 = vmatpush1.bf16.msra.mxu0 0
    %699 = vmatprep.subr.bf16.mxu0 0
    %700 = vmatpush1.bf16.msra.mxu0 0
    %701 = vmatprep.subr.bf16.mxu0 0
    %702 = vmatpush1.bf16.msra.mxu0 0
    %703 = vmatprep.subr.bf16.mxu0 0
    %704 = vmatpush1.bf16.msra.mxu0 0
    %705 = vmatprep.mubr.bf16.mxu0 0
    %706 = vmatmul.mubr.bf16.gmra.mrb[0].mxu0 %v223
    %v707 = vpop.f32.mrb[0].mxu0
    %v708 = vadd.f32 0.0, %v707
    %v709 = vpop.f32.mrb[0].mxu0
    %v710 = vpop.f32.mrb[0].mxu0
    %v711 = vadd.f32 0.0, %v710
    %v712 = vpop.f32.mrb[0].mxu0
    %713 = vmatprep.mubr.bf16.mxu0 0
    %714 = vmatmul.mubr.bf16.gmra.mrb[0].mxu0 %v224
    %v715 = vpop.f32.mrb[0].mxu0
    %v716 = vadd.f32 0.0, %v715
    %v717 = vpop.f32.mrb[0].mxu0
    %v718 = vpop.f32.mrb[0].mxu0
    %v719 = vadd.f32 0.0, %v718
    %v720 = vpop.f32.mrb[0].mxu0
    %721 = vmatprep.mubr.bf16.mxu0 0
    %722 = vmatmul.mubr.bf16.gmra.mrb[0].mxu0 %v225
    %v723 = vpop.f32.mrb[0].mxu0
    %v724 = vadd.f32 0.0, %v723
    %v725 = vpop.f32.mrb[0].mxu0
    %v726 = vpop.f32.mrb[0].mxu0
    %v727 = vadd.f32 0.0, %v726
    %v728 = vpop.f32.mrb[0].mxu0
    %729 = vmatprep.mubr.bf16.mxu0 0
    %730 = vmatmul.mubr.bf16.gmra.mrb[0].mxu0 %v226
    %v731 = vpop.f32.mrb[0].mxu0
    %v732 = vadd.f32 0.0, %v731
    %v733 = vpop.f32.mrb[0].mxu0
    %v734 = vpop.f32.mrb[0].mxu0
    %v735 = vadd.f32 0.0, %v734
    %v736 = vpop.f32.mrb[0].mxu0
    %737 = vmatprep.mubr.bf16.mxu0 0
    %738 = vmatmul.mubr.bf16.gmra.mrb[0].mxu0 %v227
    %v739 = vpop.f32.mrb[0].mxu0
    %v740 = vadd.f32 0.0, %v739
    %v741 = vpop.f32.mrb[0].mxu0
    %v742 = vpop.f32.mrb[0].mxu0
    %v743 = vadd.f32 0.0, %v742
    %v744 = vpop.f32.mrb[0].mxu0
    %745 = vmatprep.mubr.bf16.mxu0 0
    %746 = vmatmul.mubr.bf16.gmra.mrb[0].mxu0 %v228
    %v747 = vpop.f32.mrb[0].mxu0
    %v748 = vadd.f32 0.0, %v747
    %v749 = vpop.f32.mrb[0].mxu0
    %v750 = vpop.f32.mrb[0].mxu0
    %v751 = vadd.f32 0.0, %v750
    %v752 = vpop.f32.mrb[0].mxu0
    %753 = vmatprep.mubr.bf16.mxu0 0
    %754 = vmatmul.mubr.bf16.gmra.mrb[0].mxu0 %v229
    %v755 = vpop.f32.mrb[0].mxu0
    %v756 = vadd.f32 0.0, %v755
    %v757 = vpop.f32.mrb[0].mxu0
    %v758 = vpop.f32.mrb[0].mxu0
    %v759 = vadd.f32 0.0, %v758
    %v760 = vpop.f32.mrb[0].mxu0
    %761 = vmatprep.mubr.bf16.mxu0 0
    %762 = vmatmul.mubr.bf16.gmra.mrb[0].mxu0 %v230
    %v763 = vpop.f32.mrb[0].mxu0
    %v764 = vadd.f32 0.0, %v763
    %v765 = vpop.f32.mrb[0].mxu0
    %v766 = vpop.f32.mrb[0].mxu0
    %v767 = vadd.f32 0.0, %v766
    %v768 = vpop.f32.mrb[0].mxu0
    %769 = vdwg.mxu0
    %v786 = vunpack.c.l.b16 %v63
    %v787 = vunpack.c.l.b16 %v64
    %v788 = vunpack.c.l.b16 %v65
    %v789 = vunpack.c.l.b16 %v66
    %v790 = vunpack.c.l.b16 %v67
    %v791 = vunpack.c.l.b16 %v68
    %v792 = vunpack.c.l.b16 %v69
    %v793 = vunpack.c.l.b16 %v70
    %v794 = vunpack.c.l.b16 %v71
    %v795 = vunpack.c.l.b16 %v72
    %v796 = vunpack.c.l.b16 %v73
    %v797 = vunpack.c.l.b16 %v74
    %v798 = vunpack.c.l.b16 %v75
    %v799 = vunpack.c.l.b16 %v76
    %v800 = vunpack.c.l.b16 %v77
    %v801 = vunpack.c.l.b16 %v78
    %v802 = vpack.c.b16 %v787, %v786
    %v803 = vpack.c.b16 %v789, %v788
    %v804 = vpack.c.b16 %v791, %v790
    %v805 = vpack.c.b16 %v793, %v792
    %v806 = vpack.c.b16 %v795, %v794
    %v807 = vpack.c.b16 %v797, %v796
    %v808 = vpack.c.b16 %v799, %v798
    %v809 = vpack.c.b16 %v801, %v800
    %v866 = vunpack.c.l.b16 %v79
    %v867 = vunpack.c.h.b16 %v79
    %v868 = vunpack.c.l.b16 %v80
    %v869 = vunpack.c.h.b16 %v80
    %v870 = vunpack.c.l.b16 %v81
    %v871 = vunpack.c.l.b16 %v82
    %v872 = vunpack.c.h.b16 %v82
    %v873 = vunpack.c.l.b16 %v83
    %v874 = vunpack.c.h.b16 %v83
    %v875 = vunpack.c.l.b16 %v84
    %v876 = vunpack.c.l.b16 %v85
    %v877 = vunpack.c.h.b16 %v85
    %v878 = vunpack.c.l.b16 %v86
    %v879 = vunpack.c.h.b16 %v86
    %v880 = vunpack.c.l.b16 %v87
    %v881 = vunpack.c.l.b16 %v88
    %v882 = vunpack.c.h.b16 %v88
    %v883 = vunpack.c.l.b16 %v89
    %v884 = vunpack.c.h.b16 %v89
    %v885 = vunpack.c.l.b16 %v90
    %v886 = vunpack.c.l.b16 %v91
    %v887 = vunpack.c.h.b16 %v91
    %v888 = vunpack.c.l.b16 %v92
    %v889 = vunpack.c.h.b16 %v92
    %v890 = vunpack.c.l.b16 %v93
    %v891 = vunpack.c.l.b16 %v94
    %v892 = vunpack.c.h.b16 %v94
    %v893 = vunpack.c.l.b16 %v95
    %v894 = vunpack.c.h.b16 %v95
    %v895 = vunpack.c.l.b16 %v96
    %v896 = vunpack.c.l.b16 %v97
    %v897 = vunpack.c.h.b16 %v97
    %v898 = vunpack.c.l.b16 %v98
    %v899 = vunpack.c.h.b16 %v98
    %v900 = vunpack.c.l.b16 %v99
    %v901 = vunpack.c.l.b16 %v100
    %v902 = vunpack.c.h.b16 %v100
    %v903 = vunpack.c.l.b16 %v101
    %v904 = vunpack.c.h.b16 %v101
    %v905 = vunpack.c.l.b16 %v102
    %v906 = vunpack.c.l.b16 %v103
    %v907 = vunpack.c.h.b16 %v103
    %v908 = vunpack.c.l.b16 %v104
    %v909 = vunpack.c.h.b16 %v104
    %v910 = vunpack.c.l.b16 %v105
    %v911 = vunpack.c.l.b16 %v106
    %v912 = vunpack.c.h.b16 %v106
    %v913 = vunpack.c.l.b16 %v107
    %v914 = vunpack.c.h.b16 %v107
    %v915 = vunpack.c.l.b16 %v108
    %v916 = vunpack.c.l.b16 %v109
    %v917 = vunpack.c.h.b16 %v109
    %v918 = vunpack.c.l.b16 %v110
    %v919 = vunpack.c.h.b16 %v110
    %v920 = vunpack.c.l.b16 %v111
    %v921 = vunpack.c.l.b16 %v112
    %v922 = vunpack.c.h.b16 %v112
    %v923 = vunpack.c.l.b16 %v113
    %v924 = vunpack.c.h.b16 %v113
    %v925 = vunpack.c.l.b16 %v114
    %v926 = vunpack.c.l.b16 %v115
    %v927 = vunpack.c.h.b16 %v115
    %v928 = vunpack.c.l.b16 %v116
    %v929 = vunpack.c.h.b16 %v116
    %v930 = vunpack.c.l.b16 %v117
    %v931 = vunpack.c.l.b16 %v118
    %v932 = vunpack.c.h.b16 %v118
    %v933 = vunpack.c.l.b16 %v119
    %v934 = vunpack.c.h.b16 %v119
    %v935 = vunpack.c.l.b16 %v120
    %v936 = vunpack.c.l.b16 %v121
    %v937 = vunpack.c.h.b16 %v121
    %v938 = vunpack.c.l.b16 %v122
    %v939 = vunpack.c.h.b16 %v122
    %v940 = vunpack.c.l.b16 %v123
    %v941 = vunpack.c.l.b16 %v124
    %v942 = vunpack.c.h.b16 %v124
    %v943 = vunpack.c.l.b16 %v125
    %v944 = vunpack.c.h.b16 %v125
    %v945 = vunpack.c.l.b16 %v126
    %v946 = vpack.c.b16 %v871, %v866
    %v947 = vpack.c.b16 %v872, %v867
    %v948 = vpack.c.b16 %v873, %v868
    %v949 = vpack.c.b16 %v874, %v869
    %v950 = vpack.c.b16 %v875, %v870
    %v951 = vpack.c.b16 %v881, %v876
    %v952 = vpack.c.b16 %v882, %v877
    %v953 = vpack.c.b16 %v883, %v878
    %v954 = vpack.c.b16 %v884, %v879
    %v955 = vpack.c.b16 %v885, %v880
    %v956 = vpack.c.b16 %v891, %v886
    %v957 = vpack.c.b16 %v892, %v887
    %v958 = vpack.c.b16 %v893, %v888
    %v959 = vpack.c.b16 %v894, %v889
    %v960 = vpack.c.b16 %v895, %v890
    %v961 = vpack.c.b16 %v901, %v896
    %v962 = vpack.c.b16 %v902, %v897
    %v963 = vpack.c.b16 %v903, %v898
    %v964 = vpack.c.b16 %v904, %v899
    %v965 = vpack.c.b16 %v905, %v900
    %v966 = vpack.c.b16 %v911, %v906
    %v967 = vpack.c.b16 %v912, %v907
    %v968 = vpack.c.b16 %v913, %v908
    %v969 = vpack.c.b16 %v914, %v909
    %v970 = vpack.c.b16 %v915, %v910
    %v971 = vpack.c.b16 %v921, %v916
    %v972 = vpack.c.b16 %v922, %v917
    %v973 = vpack.c.b16 %v923, %v918
    %v974 = vpack.c.b16 %v924, %v919
    %v975 = vpack.c.b16 %v925, %v920
    %v976 = vpack.c.b16 %v931, %v926
    %v977 = vpack.c.b16 %v932, %v927
    %v978 = vpack.c.b16 %v933, %v928
    %v979 = vpack.c.b16 %v934, %v929
    %v980 = vpack.c.b16 %v935, %v930
    %v981 = vpack.c.b16 %v941, %v936
    %v982 = vpack.c.b16 %v942, %v937
    %v983 = vpack.c.b16 %v943, %v938
    %v984 = vpack.c.b16 %v944, %v939
    %v985 = vpack.c.b16 %v945, %v940
    %1026 = vmatprep.subr.bf16.mxu0 %v947
    %1027 = vmatpush1.bf16.msra.mxu0 %v946
    %1028 = vmatprep.subr.bf16.mxu0 %v952
    %1029 = vmatpush1.bf16.msra.mxu0 %v951
    %1030 = vmatprep.subr.bf16.mxu0 %v957
    %1031 = vmatpush1.bf16.msra.mxu0 %v956
    %1032 = vmatprep.subr.bf16.mxu0 %v962
    %1033 = vmatpush1.bf16.msra.mxu0 %v961
    %1034 = vmatprep.subr.bf16.mxu0 %v967
    %1035 = vmatpush1.bf16.msra.mxu0 %v966
    %1036 = vmatprep.subr.bf16.mxu0 %v972
    %1037 = vmatpush1.bf16.msra.mxu0 %v971
    %1038 = vmatprep.subr.bf16.mxu0 %v977
    %1039 = vmatpush1.bf16.msra.mxu0 %v976
    %1040 = vmatprep.subr.bf16.mxu0 %v982
    %1041 = vmatpush1.bf16.msra.mxu0 %v981
    %1042 = vmatprep.subr.bf16.mxu0 0
    %1043 = vmatpush1.bf16.msra.mxu0 0
    %1044 = vmatprep.subr.bf16.mxu0 0
    %1045 = vmatpush1.bf16.msra.mxu0 0
    %1046 = vmatprep.subr.bf16.mxu0 0
    %1047 = vmatpush1.bf16.msra.mxu0 0
    %1048 = vmatprep.subr.bf16.mxu0 0
    %1049 = vmatpush1.bf16.msra.mxu0 0
    %1050 = vmatprep.subr.bf16.mxu0 0
    %1051 = vmatpush1.bf16.msra.mxu0 0
    %1052 = vmatprep.subr.bf16.mxu0 0
    %1053 = vmatpush1.bf16.msra.mxu0 0
    %1054 = vmatprep.subr.bf16.mxu0 0
    %1055 = vmatpush1.bf16.msra.mxu0 0
    %1056 = vmatprep.subr.bf16.mxu0 0
    %1057 = vmatpush1.bf16.msra.mxu0 0
    %1058 = vmatprep.mubr.bf16.mxu0 0
    %1059 = vmatmul.mubr.bf16.gmra.mrb[0].mxu0 %v802
    %v1060 = vpop.f32.mrb[0].mxu0
    %v1061 = vadd.f32 %v482, %v1060
    %v1062 = vpop.f32.mrb[0].mxu0
    %v1063 = vadd.f32 %v484, %v1062
    %v1064 = vpop.f32.mrb[0].mxu0
    %v1065 = vadd.f32 %v486, %v1064
    %v1066 = vpop.f32.mrb[0].mxu0
    %v1067 = vadd.f32 %v488, %v1066
    %1068 = vmatprep.mubr.bf16.mxu0 0
    %1069 = vmatmul.mubr.bf16.gmra.mrb[0].mxu0 %v803
    %v1070 = vpop.f32.mrb[0].mxu0
    %v1071 = vadd.f32 %v492, %v1070
    %v1072 = vpop.f32.mrb[0].mxu0
    %v1073 = vadd.f32 %v494, %v1072
    %v1074 = vpop.f32.mrb[0].mxu0
    %v1075 = vadd.f32 %v496, %v1074
    %v1076 = vpop.f32.mrb[0].mxu0
    %v1077 = vadd.f32 %v498, %v1076
    %1078 = vmatprep.mubr.bf16.mxu0 0
    %1079 = vmatmul.mubr.bf16.gmra.mrb[0].mxu0 %v804
    %v1080 = vpop.f32.mrb[0].mxu0
    %v1081 = vadd.f32 %v502, %v1080
    %v1082 = vpop.f32.mrb[0].mxu0
    %v1083 = vadd.f32 %v504, %v1082
    %v1084 = vpop.f32.mrb[0].mxu0
    %v1085 = vadd.f32 %v506, %v1084
    %v1086 = vpop.f32.mrb[0].mxu0
    %v1087 = vadd.f32 %v508, %v1086
    %1088 = vmatprep.mubr.bf16.mxu0 0
    %1089 = vmatmul.mubr.bf16.gmra.mrb[0].mxu0 %v805
    %v1090 = vpop.f32.mrb[0].mxu0
    %v1091 = vadd.f32 %v512, %v1090
    %v1092 = vpop.f32.mrb[0].mxu0
    %v1093 = vadd.f32 %v514, %v1092
    %v1094 = vpop.f32.mrb[0].mxu0
    %v1095 = vadd.f32 %v516, %v1094
    %v1096 = vpop.f32.mrb[0].mxu0
    %v1097 = vadd.f32 %v518, %v1096
    %1098 = vmatprep.mubr.bf16.mxu0 0
    %1099 = vmatmul.mubr.bf16.gmra.mrb[0].mxu0 %v806
    %v1100 = vpop.f32.mrb[0].mxu0
    %v1101 = vadd.f32 %v522, %v1100
    %v1102 = vpop.f32.mrb[0].mxu0
    %v1103 = vadd.f32 %v524, %v1102
    %v1104 = vpop.f32.mrb[0].mxu0
    %v1105 = vadd.f32 %v526, %v1104
    %v1106 = vpop.f32.mrb[0].mxu0
    %v1107 = vadd.f32 %v528, %v1106
    %1108 = vmatprep.mubr.bf16.mxu0 0
    %1109 = vmatmul.mubr.bf16.gmra.mrb[0].mxu0 %v807
    %v1110 = vpop.f32.mrb[0].mxu0
    %v1111 = vadd.f32 %v532, %v1110
    %v1112 = vpop.f32.mrb[0].mxu0
    %v1113 = vadd.f32 %v534, %v1112
    %v1114 = vpop.f32.mrb[0].mxu0
    %v1115 = vadd.f32 %v536, %v1114
    %v1116 = vpop.f32.mrb[0].mxu0
    %v1117 = vadd.f32 %v538, %v1116
    %1118 = vmatprep.mubr.bf16.mxu0 0
    %1119 = vmatmul.mubr.bf16.gmra.mrb[0].mxu0 %v808
    %v1120 = vpop.f32.mrb[0].mxu0
    %v1121 = vadd.f32 %v542, %v1120
    %v1122 = vpop.f32.mrb[0].mxu0
    %v1123 = vadd.f32 %v544, %v1122
    %v1124 = vpop.f32.mrb[0].mxu0
    %v1125 = vadd.f32 %v546, %v1124
    %v1126 = vpop.f32.mrb[0].mxu0
    %v1127 = vadd.f32 %v548, %v1126
    %1128 = vmatprep.mubr.bf16.mxu0 0
    %1129 = vmatmul.mubr.bf16.gmra.mrb[0].mxu0 %v809
    %v1130 = vpop.f32.mrb[0].mxu0
    %v1131 = vadd.f32 %v552, %v1130
    %v1132 = vpop.f32.mrb[0].mxu0
    %v1133 = vadd.f32 %v554, %v1132
    %v1134 = vpop.f32.mrb[0].mxu0
    %v1135 = vadd.f32 %v556, %v1134
    %v1136 = vpop.f32.mrb[0].mxu0
    %v1137 = vadd.f32 %v558, %v1136
    %1138 = vdwg.mxu0
    %1139 = vmatprep.subr.bf16.mxu0 %v949
    %1140 = vmatpush1.bf16.msra.mxu0 %v948
    %1141 = vmatprep.subr.bf16.mxu0 %v954
    %1142 = vmatpush1.bf16.msra.mxu0 %v953
    %1143 = vmatprep.subr.bf16.mxu0 %v959
    %1144 = vmatpush1.bf16.msra.mxu0 %v958
    %1145 = vmatprep.subr.bf16.mxu0 %v964
    %1146 = vmatpush1.bf16.msra.mxu0 %v963
    %1147 = vmatprep.subr.bf16.mxu0 %v969
    %1148 = vmatpush1.bf16.msra.mxu0 %v968
    %1149 = vmatprep.subr.bf16.mxu0 %v974
    %1150 = vmatpush1.bf16.msra.mxu0 %v973
    %1151 = vmatprep.subr.bf16.mxu0 %v979
    %1152 = vmatpush1.bf16.msra.mxu0 %v978
    %1153 = vmatprep.subr.bf16.mxu0 %v984
    %1154 = vmatpush1.bf16.msra.mxu0 %v983
    %1155 = vmatprep.subr.bf16.mxu0 0
    %1156 = vmatpush1.bf16.msra.mxu0 0
    %1157 = vmatprep.subr.bf16.mxu0 0
    %1158 = vmatpush1.bf16.msra.mxu0 0
    %1159 = vmatprep.subr.bf16.mxu0 0
    %1160 = vmatpush1.bf16.msra.mxu0 0
    %1161 = vmatprep.subr.bf16.mxu0 0
    %1162 = vmatpush1.bf16.msra.mxu0 0
    %1163 = vmatprep.subr.bf16.mxu0 0
    %1164 = vmatpush1.bf16.msra.mxu0 0
    %1165 = vmatprep.subr.bf16.mxu0 0
    %1166 = vmatpush1.bf16.msra.mxu0 0
    %1167 = vmatprep.subr.bf16.mxu0 0
    %1168 = vmatpush1.bf16.msra.mxu0 0
    %1169 = vmatprep.subr.bf16.mxu0 0
    %1170 = vmatpush1.bf16.msra.mxu0 0
    %1171 = vmatprep.mubr.bf16.mxu0 0
    %1172 = vmatmul.mubr.bf16.gmra.mrb[0].mxu0 %v802
    %v1173 = vpop.f32.mrb[0].mxu0
    %v1174 = vadd.f32 %v595, %v1173
    %v1175 = vpop.f32.mrb[0].mxu0
    %v1176 = vadd.f32 %v597, %v1175
    %v1177 = vpop.f32.mrb[0].mxu0
    %v1178 = vadd.f32 %v599, %v1177
    %v1179 = vpop.f32.mrb[0].mxu0
    %v1180 = vadd.f32 %v601, %v1179
    %1181 = vmatprep.mubr.bf16.mxu0 0
    %1182 = vmatmul.mubr.bf16.gmra.mrb[0].mxu0 %v803
    %v1183 = vpop.f32.mrb[0].mxu0
    %v1184 = vadd.f32 %v605, %v1183
    %v1185 = vpop.f32.mrb[0].mxu0
    %v1186 = vadd.f32 %v607, %v1185
    %v1187 = vpop.f32.mrb[0].mxu0
    %v1188 = vadd.f32 %v609, %v1187
    %v1189 = vpop.f32.mrb[0].mxu0
    %v1190 = vadd.f32 %v611, %v1189
    %1191 = vmatprep.mubr.bf16.mxu0 0
    %1192 = vmatmul.mubr.bf16.gmra.mrb[0].mxu0 %v804
    %v1193 = vpop.f32.mrb[0].mxu0
    %v1194 = vadd.f32 %v615, %v1193
    %v1195 = vpop.f32.mrb[0].mxu0
    %v1196 = vadd.f32 %v617, %v1195
    %v1197 = vpop.f32.mrb[0].mxu0
    %v1198 = vadd.f32 %v619, %v1197
    %v1199 = vpop.f32.mrb[0].mxu0
    %v1200 = vadd.f32 %v621, %v1199
    %1201 = vmatprep.mubr.bf16.mxu0 0
    %1202 = vmatmul.mubr.bf16.gmra.mrb[0].mxu0 %v805
    %v1203 = vpop.f32.mrb[0].mxu0
    %v1204 = vadd.f32 %v625, %v1203
    %v1205 = vpop.f32.mrb[0].mxu0
    %v1206 = vadd.f32 %v627, %v1205
    %v1207 = vpop.f32.mrb[0].mxu0
    %v1208 = vadd.f32 %v629, %v1207
    %v1209 = vpop.f32.mrb[0].mxu0
    %v1210 = vadd.f32 %v631, %v1209
    %1211 = vmatprep.mubr.bf16.mxu0 0
    %1212 = vmatmul.mubr.bf16.gmra.mrb[0].mxu0 %v806
    %v1213 = vpop.f32.mrb[0].mxu0
    %v1214 = vadd.f32 %v635, %v1213
    %v1215 = vpop.f32.mrb[0].mxu0
    %v1216 = vadd.f32 %v637, %v1215
    %v1217 = vpop.f32.mrb[0].mxu0
    %v1218 = vadd.f32 %v639, %v1217
    %v1219 = vpop.f32.mrb[0].mxu0
    %v1220 = vadd.f32 %v641, %v1219
    %1221 = vmatprep.mubr.bf16.mxu0 0
    %1222 = vmatmul.mubr.bf16.gmra.mrb[0].mxu0 %v807
    %v1223 = vpop.f32.mrb[0].mxu0
    %v1224 = vadd.f32 %v645, %v1223
    %v1225 = vpop.f32.mrb[0].mxu0
    %v1226 = vadd.f32 %v647, %v1225
    %v1227 = vpop.f32.mrb[0].mxu0
    %v1228 = vadd.f32 %v649, %v1227
    %v1229 = vpop.f32.mrb[0].mxu0
    %v1230 = vadd.f32 %v651, %v1229
    %1231 = vmatprep.mubr.bf16.mxu0 0
    %1232 = vmatmul.mubr.bf16.gmra.mrb[0].mxu0 %v808
    %v1233 = vpop.f32.mrb[0].mxu0
    %v1234 = vadd.f32 %v655, %v1233
    %v1235 = vpop.f32.mrb[0].mxu0
    %v1236 = vadd.f32 %v657, %v1235
    %v1237 = vpop.f32.mrb[0].mxu0
    %v1238 = vadd.f32 %v659, %v1237
    %v1239 = vpop.f32.mrb[0].mxu0
    %v1240 = vadd.f32 %v661, %v1239
    %1241 = vmatprep.mubr.bf16.mxu0 0
    %1242 = vmatmul.mubr.bf16.gmra.mrb[0].mxu0 %v809
    %v1243 = vpop.f32.mrb[0].mxu0
    %v1244 = vadd.f32 %v665, %v1243
    %v1245 = vpop.f32.mrb[0].mxu0
    %v1246 = vadd.f32 %v667, %v1245
    %v1247 = vpop.f32.mrb[0].mxu0
    %v1248 = vadd.f32 %v669, %v1247
    %v1249 = vpop.f32.mrb[0].mxu0
    %v1250 = vadd.f32 %v671, %v1249
    %1251 = vdwg.mxu0
    %1252 = vmatprep.subr.bf16.mxu0 0
    %1253 = vmatpush1.bf16.msra.mxu0 %v950
    %1254 = vmatprep.subr.bf16.mxu0 0
    %1255 = vmatpush1.bf16.msra.mxu0 %v955
    %1256 = vmatprep.subr.bf16.mxu0 0
    %1257 = vmatpush1.bf16.msra.mxu0 %v960
    %1258 = vmatprep.subr.bf16.mxu0 0
    %1259 = vmatpush1.bf16.msra.mxu0 %v965
    %1260 = vmatprep.subr.bf16.mxu0 0
    %1261 = vmatpush1.bf16.msra.mxu0 %v970
    %1262 = vmatprep.subr.bf16.mxu0 0
    %1263 = vmatpush1.bf16.msra.mxu0 %v975
    %1264 = vmatprep.subr.bf16.mxu0 0
    %1265 = vmatpush1.bf16.msra.mxu0 %v980
    %1266 = vmatprep.subr.bf16.mxu0 0
    %1267 = vmatpush1.bf16.msra.mxu0 %v985
    %1268 = vmatprep.subr.bf16.mxu0 0
    %1269 = vmatpush1.bf16.msra.mxu0 0
    %1270 = vmatprep.subr.bf16.mxu0 0
    %1271 = vmatpush1.bf16.msra.mxu0 0
    %1272 = vmatprep.subr.bf16.mxu0 0
    %1273 = vmatpush1.bf16.msra.mxu0 0
    %1274 = vmatprep.subr.bf16.mxu0 0
    %1275 = vmatpush1.bf16.msra.mxu0 0
    %1276 = vmatprep.subr.bf16.mxu0 0
    %1277 = vmatpush1.bf16.msra.mxu0 0
    %1278 = vmatprep.subr.bf16.mxu0 0
    %1279 = vmatpush1.bf16.msra.mxu0 0
    %1280 = vmatprep.subr.bf16.mxu0 0
    %1281 = vmatpush1.bf16.msra.mxu0 0
    %1282 = vmatprep.subr.bf16.mxu0 0
    %1283 = vmatpush1.bf16.msra.mxu0 0
    %1284 = vmatprep.mubr.bf16.mxu0 0
    %1285 = vmatmul.mubr.bf16.gmra.mrb[0].mxu0 %v802
    %v1286 = vpop.f32.mrb[0].mxu0
    %v1287 = vadd.f32 %v708, %v1286
    %v1288 = vpop.f32.mrb[0].mxu0
    %v1289 = vpop.f32.mrb[0].mxu0
    %v1290 = vadd.f32 %v711, %v1289
    %v1291 = vpop.f32.mrb[0].mxu0
    %1292 = vmatprep.mubr.bf16.mxu0 0
    %1293 = vmatmul.mubr.bf16.gmra.mrb[0].mxu0 %v803
    %v1294 = vpop.f32.mrb[0].mxu0
    %v1295 = vadd.f32 %v716, %v1294
    %v1296 = vpop.f32.mrb[0].mxu0
    %v1297 = vpop.f32.mrb[0].mxu0
    %v1298 = vadd.f32 %v719, %v1297
    %v1299 = vpop.f32.mrb[0].mxu0
    %1300 = vmatprep.mubr.bf16.mxu0 0
    %1301 = vmatmul.mubr.bf16.gmra.mrb[0].mxu0 %v804
    %v1302 = vpop.f32.mrb[0].mxu0
    %v1303 = vadd.f32 %v724, %v1302
    %v1304 = vpop.f32.mrb[0].mxu0
    %v1305 = vpop.f32.mrb[0].mxu0
    %v1306 = vadd.f32 %v727, %v1305
    %v1307 = vpop.f32.mrb[0].mxu0
    %1308 = vmatprep.mubr.bf16.mxu0 0
    %1309 = vmatmul.mubr.bf16.gmra.mrb[0].mxu0 %v805
    %v1310 = vpop.f32.mrb[0].mxu0
    %v1311 = vadd.f32 %v732, %v1310
    %v1312 = vpop.f32.mrb[0].mxu0
    %v1313 = vpop.f32.mrb[0].mxu0
    %v1314 = vadd.f32 %v735, %v1313
    %v1315 = vpop.f32.mrb[0].mxu0
    %1316 = vmatprep.mubr.bf16.mxu0 0
    %1317 = vmatmul.mubr.bf16.gmra.mrb[0].mxu0 %v806
    %v1318 = vpop.f32.mrb[0].mxu0
    %v1319 = vadd.f32 %v740, %v1318
    %v1320 = vpop.f32.mrb[0].mxu0
    %v1321 = vpop.f32.mrb[0].mxu0
    %v1322 = vadd.f32 %v743, %v1321
    %v1323 = vpop.f32.mrb[0].mxu0
    %1324 = vmatprep.mubr.bf16.mxu0 0
    %1325 = vmatmul.mubr.bf16.gmra.mrb[0].mxu0 %v807
    %v1326 = vpop.f32.mrb[0].mxu0
    %v1327 = vadd.f32 %v748, %v1326
    %v1328 = vpop.f32.mrb[0].mxu0
    %v1329 = vpop.f32.mrb[0].mxu0
    %v1330 = vadd.f32 %v751, %v1329
    %v1331 = vpop.f32.mrb[0].mxu0
    %1332 = vmatprep.mubr.bf16.mxu0 0
    %1333 = vmatmul.mubr.bf16.gmra.mrb[0].mxu0 %v808
    %v1334 = vpop.f32.mrb[0].mxu0
    %v1335 = vadd.f32 %v756, %v1334
    %v1336 = vpop.f32.mrb[0].mxu0
    %v1337 = vpop.f32.mrb[0].mxu0
    %v1338 = vadd.f32 %v759, %v1337
    %v1339 = vpop.f32.mrb[0].mxu0
    %1340 = vmatprep.mubr.bf16.mxu0 0
    %1341 = vmatmul.mubr.bf16.gmra.mrb[0].mxu0 %v809
    %v1342 = vpop.f32.mrb[0].mxu0
    %v1343 = vadd.f32 %v764, %v1342
    %v1344 = vpop.f32.mrb[0].mxu0
    %v1345 = vpop.f32.mrb[0].mxu0
    %v1346 = vadd.f32 %v767, %v1345
    %v1347 = vpop.f32.mrb[0].mxu0
    %1348 = vdwg.mxu0
    %v1349 = vld [vmem:[%s2] sm:$0xf]
    %v1350 = vld [vmem:[%s2 + $0x4] sm:$0xf]
    %v1351 = vld [vmem:[%s2 + $0x8] sm:$0xf]
    %v1352 = vld [vmem:[%s2 + $0xc] sm:$0xf]
    %v1353 = vld [vmem:[%s2 + $0x10] sm:$0xf]
    %v1354 = vld [vmem:[%s2 + $0x14] sm:$0xf]
    %v1355 = vld [vmem:[%s2 + $0x18] sm:$0xf]
    %v1356 = vld [vmem:[%s2 + $0x1c] sm:$0xf]
    %v1357 = vld [vmem:[%s2 + $0x20] sm:$0xf]
    %v1358 = vld [vmem:[%s2 + $0x24] sm:$0xf]
    %v1359 = vld [vmem:[%s2 + $0x28] sm:$0xf]
    %v1360 = vld [vmem:[%s2 + $0x2c] sm:$0xf]
    %v1361 = vld [vmem:[%s2 + $0x30] sm:$0xf]
    %v1362 = vld [vmem:[%s2 + $0x34] sm:$0xf]
    %v1363 = vld [vmem:[%s2 + $0x38] sm:$0xf]
    %v1364 = vld [vmem:[%s2 + $0x3c] sm:$0xf]
    %v1365 = vld [vmem:[#allocation4] sm:$0xff]
    %v1366 = vld [vmem:[#allocation4 + $0x8] sm:$0xff]
    %v1367 = vld [vmem:[#allocation4 + $0x10] sm:$0xf]
    %v1368 = vld [vmem:[#allocation4 + $0x14] sm:$0xff]
    %v1369 = vld [vmem:[#allocation4 + $0x1c] sm:$0xff]
    %v1370 = vld [vmem:[#allocation4 + $0x24] sm:$0xf]
    %v1371 = vld [vmem:[#allocation4 + $0x28] sm:$0xff]
    %v1372 = vld [vmem:[#allocation4 + $0x30] sm:$0xff]
    %v1373 = vld [vmem:[#allocation4 + $0x38] sm:$0xf]
    %v1374 = vld [vmem:[#allocation4 + $0x3c] sm:$0xff]
    %v1375 = vld [vmem:[#allocation4 + $0x44] sm:$0xff]
    %v1376 = vld [vmem:[#allocation4 + $0x4c] sm:$0xf]
    %v1377 = vld [vmem:[#allocation4 + $0x50] sm:$0xff]
    %v1378 = vld [vmem:[#allocation4 + $0x58] sm:$0xff]
    %v1379 = vld [vmem:[#allocation4 + $0x60] sm:$0xf]
    %v1380 = vld [vmem:[#allocation4 + $0x64] sm:$0xff]
    %v1381 = vld [vmem:[#allocation4 + $0x6c] sm:$0xff]
    %v1382 = vld [vmem:[#allocation4 + $0x74] sm:$0xf]
    %v1383 = vld [vmem:[#allocation4 + $0x78] sm:$0xff]
    %v1384 = vld [vmem:[#allocation4 + $0x80] sm:$0xff]
    %v1385 = vld [vmem:[#allocation4 + $0x88] sm:$0xf]
    %v1386 = vld [vmem:[#allocation4 + $0x8c] sm:$0xff]
    %v1387 = vld [vmem:[#allocation4 + $0x94] sm:$0xff]
    %v1388 = vld [vmem:[#allocation4 + $0x9c] sm:$0xf]
    %v1389 = vld [vmem:[#allocation4 + $0xa0] sm:$0xff]
    %v1390 = vld [vmem:[#allocation4 + $0xa8] sm:$0xff]
    %v1391 = vld [vmem:[#allocation4 + $0xb0] sm:$0xf]
    %v1392 = vld [vmem:[#allocation4 + $0xb4] sm:$0xff]
    %v1393 = vld [vmem:[#allocation4 + $0xbc] sm:$0xff]
    %v1394 = vld [vmem:[#allocation4 + $0xc4] sm:$0xf]
    %v1395 = vld [vmem:[#allocation4 + $0xc8] sm:$0xff]
    %v1396 = vld [vmem:[#allocation4 + $0xd0] sm:$0xff]
    %v1397 = vld [vmem:[#allocation4 + $0xd8] sm:$0xf]
    %v1398 = vld [vmem:[#allocation4 + $0xdc] sm:$0xff]
    %v1399 = vld [vmem:[#allocation4 + $0xe4] sm:$0xff]
    %v1400 = vld [vmem:[#allocation4 + $0xec] sm:$0xf]
    %v1401 = vld [vmem:[#allocation4 + $0xf0] sm:$0xff]
    %v1402 = vld [vmem:[#allocation4 + $0xf8] sm:$0xff]
    %v1403 = vld [vmem:[#allocation4 + $0x100] sm:$0xf]
    %v1404 = vld [vmem:[#allocation4 + $0x104] sm:$0xff]
    %v1405 = vld [vmem:[#allocation4 + $0x10c] sm:$0xff]
    %v1406 = vld [vmem:[#allocation4 + $0x114] sm:$0xf]
    %v1407 = vld [vmem:[#allocation4 + $0x118] sm:$0xff]
    %v1408 = vld [vmem:[#allocation4 + $0x120] sm:$0xff]
    %v1409 = vld [vmem:[#allocation4 + $0x128] sm:$0xf]
    %v1410 = vld [vmem:[#allocation4 + $0x12c] sm:$0xff]
    %v1411 = vld [vmem:[#allocation4 + $0x134] sm:$0xff]
    %v1412 = vld [vmem:[#allocation4 + $0x13c] sm:$0xf]
    %v1429 = vunpack.c.l.b16 %v1349
    %v1430 = vunpack.c.l.b16 %v1350
    %v1431 = vunpack.c.l.b16 %v1351
    %v1432 = vunpack.c.l.b16 %v1352
    %v1433 = vunpack.c.l.b16 %v1353
    %v1434 = vunpack.c.l.b16 %v1354
    %v1435 = vunpack.c.l.b16 %v1355
    %v1436 = vunpack.c.l.b16 %v1356
    %v1437 = vunpack.c.l.b16 %v1357
    %v1438 = vunpack.c.l.b16 %v1358
    %v1439 = vunpack.c.l.b16 %v1359
    %v1440 = vunpack.c.l.b16 %v1360
    %v1441 = vunpack.c.l.b16 %v1361
    %v1442 = vunpack.c.l.b16 %v1362
    %v1443 = vunpack.c.l.b16 %v1363
    %v1444 = vunpack.c.l.b16 %v1364
    %v1445 = vpack.c.b16 %v1430, %v1429
    %v1446 = vpack.c.b16 %v1432, %v1431
    %v1447 = vpack.c.b16 %v1434, %v1433
    %v1448 = vpack.c.b16 %v1436, %v1435
    %v1449 = vpack.c.b16 %v1438, %v1437
    %v1450 = vpack.c.b16 %v1440, %v1439
    %v1451 = vpack.c.b16 %v1442, %v1441
    %v1452 = vpack.c.b16 %v1444, %v1443
    %v1509 = vunpack.c.l.b16 %v1365
    %v1510 = vunpack.c.h.b16 %v1365
    %v1511 = vunpack.c.l.b16 %v1366
    %v1512 = vunpack.c.h.b16 %v1366
    %v1513 = vunpack.c.l.b16 %v1367
    %v1514 = vunpack.c.l.b16 %v1368
    %v1515 = vunpack.c.h.b16 %v1368
    %v1516 = vunpack.c.l.b16 %v1369
    %v1517 = vunpack.c.h.b16 %v1369
    %v1518 = vunpack.c.l.b16 %v1370
    %v1519 = vunpack.c.l.b16 %v1371
    %v1520 = vunpack.c.h.b16 %v1371
    %v1521 = vunpack.c.l.b16 %v1372
    %v1522 = vunpack.c.h.b16 %v1372
    %v1523 = vunpack.c.l.b16 %v1373
    %v1524 = vunpack.c.l.b16 %v1374
    %v1525 = vunpack.c.h.b16 %v1374
    %v1526 = vunpack.c.l.b16 %v1375
    %v1527 = vunpack.c.h.b16 %v1375
    %v1528 = vunpack.c.l.b16 %v1376
    %v1529 = vunpack.c.l.b16 %v1377
    %v1530 = vunpack.c.h.b16 %v1377
    %v1531 = vunpack.c.l.b16 %v1378
    %v1532 = vunpack.c.h.b16 %v1378
    %v1533 = vunpack.c.l.b16 %v1379
    %v1534 = vunpack.c.l.b16 %v1380
    %v1535 = vunpack.c.h.b16 %v1380
    %v1536 = vunpack.c.l.b16 %v1381
    %v1537 = vunpack.c.h.b16 %v1381
    %v1538 = vunpack.c.l.b16 %v1382
    %v1539 = vunpack.c.l.b16 %v1383
    %v1540 = vunpack.c.h.b16 %v1383
    %v1541 = vunpack.c.l.b16 %v1384
    %v1542 = vunpack.c.h.b16 %v1384
    %v1543 = vunpack.c.l.b16 %v1385
    %v1544 = vunpack.c.l.b16 %v1386
    %v1545 = vunpack.c.h.b16 %v1386
    %v1546 = vunpack.c.l.b16 %v1387
    %v1547 = vunpack.c.h.b16 %v1387
    %v1548 = vunpack.c.l.b16 %v1388
    %v1549 = vunpack.c.l.b16 %v1389
    %v1550 = vunpack.c.h.b16 %v1389
    %v1551 = vunpack.c.l.b16 %v1390
    %v1552 = vunpack.c.h.b16 %v1390
    %v1553 = vunpack.c.l.b16 %v1391
    %v1554 = vunpack.c.l.b16 %v1392
    %v1555 = vunpack.c.h.b16 %v1392
    %v1556 = vunpack.c.l.b16 %v1393
    %v1557 = vunpack.c.h.b16 %v1393
    %v1558 = vunpack.c.l.b16 %v1394
    %v1559 = vunpack.c.l.b16 %v1395
    %v1560 = vunpack.c.h.b16 %v1395
    %v1561 = vunpack.c.l.b16 %v1396
    %v1562 = vunpack.c.h.b16 %v1396
    %v1563 = vunpack.c.l.b16 %v1397
    %v1564 = vunpack.c.l.b16 %v1398
    %v1565 = vunpack.c.h.b16 %v1398
    %v1566 = vunpack.c.l.b16 %v1399
    %v1567 = vunpack.c.h.b16 %v1399
    %v1568 = vunpack.c.l.b16 %v1400
    %v1569 = vunpack.c.l.b16 %v1401
    %v1570 = vunpack.c.h.b16 %v1401
    %v1571 = vunpack.c.l.b16 %v1402
    %v1572 = vunpack.c.h.b16 %v1402
    %v1573 = vunpack.c.l.b16 %v1403
    %v1574 = vunpack.c.l.b16 %v1404
    %v1575 = vunpack.c.h.b16 %v1404
    %v1576 = vunpack.c.l.b16 %v1405
    %v1577 = vunpack.c.h.b16 %v1405
    %v1578 = vunpack.c.l.b16 %v1406
    %v1579 = vunpack.c.l.b16 %v1407
    %v1580 = vunpack.c.h.b16 %v1407
    %v1581 = vunpack.c.l.b16 %v1408
    %v1582 = vunpack.c.h.b16 %v1408
    %v1583 = vunpack.c.l.b16 %v1409
    %v1584 = vunpack.c.l.b16 %v1410
    %v1585 = vunpack.c.h.b16 %v1410
    %v1586 = vunpack.c.l.b16 %v1411
    %v1587 = vunpack.c.h.b16 %v1411
    %v1588 = vunpack.c.l.b16 %v1412
    %v1589 = vpack.c.b16 %v1514, %v1509
    %v1590 = vpack.c.b16 %v1515, %v1510
    %v1591 = vpack.c.b16 %v1516, %v1511
    %v1592 = vpack.c.b16 %v1517, %v1512
    %v1593 = vpack.c.b16 %v1518, %v1513
    %v1594 = vpack.c.b16 %v1524, %v1519
    %v1595 = vpack.c.b16 %v1525, %v1520
    %v1596 = vpack.c.b16 %v1526, %v1521
    %v1597 = vpack.c.b16 %v1527, %v1522
    %v1598 = vpack.c.b16 %v1528, %v1523
    %v1599 = vpack.c.b16 %v1534, %v1529
    %v1600 = vpack.c.b16 %v1535, %v1530
    %v1601 = vpack.c.b16 %v1536, %v1531
    %v1602 = vpack.c.b16 %v1537, %v1532
    %v1603 = vpack.c.b16 %v1538, %v1533
    %v1604 = vpack.c.b16 %v1544, %v1539
    %v1605 = vpack.c.b16 %v1545, %v1540
    %v1606 = vpack.c.b16 %v1546, %v1541
    %v1607 = vpack.c.b16 %v1547, %v1542
    %v1608 = vpack.c.b16 %v1548, %v1543
    %v1609 = vpack.c.b16 %v1554, %v1549
    %v1610 = vpack.c.b16 %v1555, %v1550
    %v1611 = vpack.c.b16 %v1556, %v1551
    %v1612 = vpack.c.b16 %v1557, %v1552
    %v1613 = vpack.c.b16 %v1558, %v1553
    %v1614 = vpack.c.b16 %v1564, %v1559
    %v1615 = vpack.c.b16 %v1565, %v1560
    %v1616 = vpack.c.b16 %v1566, %v1561
    %v1617 = vpack.c.b16 %v1567, %v1562
    %v1618 = vpack.c.b16 %v1568, %v1563
    %v1619 = vpack.c.b16 %v1574, %v1569
    %v1620 = vpack.c.b16 %v1575, %v1570
    %v1621 = vpack.c.b16 %v1576, %v1571
    %v1622 = vpack.c.b16 %v1577, %v1572
    %v1623 = vpack.c.b16 %v1578, %v1573
    %v1624 = vpack.c.b16 %v1584, %v1579
    %v1625 = vpack.c.b16 %v1585, %v1580
    %v1626 = vpack.c.b16 %v1586, %v1581
    %v1627 = vpack.c.b16 %v1587, %v1582
    %v1628 = vpack.c.b16 %v1588, %v1583
    %1669 = vmatprep.subr.bf16.mxu0 %v1590
    %1670 = vmatpush1.bf16.msra.mxu0 %v1589
    %1671 = vmatprep.subr.bf16.mxu0 %v1595
    %1672 = vmatpush1.bf16.msra.mxu0 %v1594
    %1673 = vmatprep.subr.bf16.mxu0 %v1600
    %1674 = vmatpush1.bf16.msra.mxu0 %v1599
    %1675 = vmatprep.subr.bf16.mxu0 %v1605
    %1676 = vmatpush1.bf16.msra.mxu0 %v1604
    %1677 = vmatprep.subr.bf16.mxu0 %v1610
    %1678 = vmatpush1.bf16.msra.mxu0 %v1609
    %1679 = vmatprep.subr.bf16.mxu0 %v1615
    %1680 = vmatpush1.bf16.msra.mxu0 %v1614
    %1681 = vmatprep.subr.bf16.mxu0 %v1620
    %1682 = vmatpush1.bf16.msra.mxu0 %v1619
    %1683 = vmatprep.subr.bf16.mxu0 %v1625
    %1684 = vmatpush1.bf16.msra.mxu0 %v1624
    %1685 = vmatprep.subr.bf16.mxu0 0
    %1686 = vmatpush1.bf16.msra.mxu0 0
    %1687 = vmatprep.subr.bf16.mxu0 0
    %1688 = vmatpush1.bf16.msra.mxu0 0
    %1689 = vmatprep.subr.bf16.mxu0 0
    %1690 = vmatpush1.bf16.msra.mxu0 0
    %1691 = vmatprep.subr.bf16.mxu0 0
    %1692 = vmatpush1.bf16.msra.mxu0 0
    %1693 = vmatprep.subr.bf16.mxu0 0
    %1694 = vmatpush1.bf16.msra.mxu0 0
    %1695 = vmatprep.subr.bf16.mxu0 0
    %1696 = vmatpush1.bf16.msra.mxu0 0
    %1697 = vmatprep.subr.bf16.mxu0 0
    %1698 = vmatpush1.bf16.msra.mxu0 0
    %1699 = vmatprep.subr.bf16.mxu0 0
    %1700 = vmatpush1.bf16.msra.mxu0 0
    %1701 = vmatprep.mubr.bf16.mxu0 0
    %1702 = vmatmul.mubr.bf16.gmra.mrb[0].mxu0 %v1445
    %v1703 = vpop.f32.mrb[0].mxu0
    %v1704 = vadd.f32 0.0, %v1703
    %v1705 = vpop.f32.mrb[0].mxu0
    %v1706 = vadd.f32 0.0, %v1705
    %v1707 = vpop.f32.mrb[0].mxu0
    %v1708 = vadd.f32 0.0, %v1707
    %v1709 = vpop.f32.mrb[0].mxu0
    %v1710 = vadd.f32 0.0, %v1709
    %1711 = vmatprep.mubr.bf16.mxu0 0
    %1712 = vmatmul.mubr.bf16.gmra.mrb[0].mxu0 %v1446
    %v1713 = vpop.f32.mrb[0].mxu0
    %v1714 = vadd.f32 0.0, %v1713
    %v1715 = vpop.f32.mrb[0].mxu0
    %v1716 = vadd.f32 0.0, %v1715
    %v1717 = vpop.f32.mrb[0].mxu0
    %v1718 = vadd.f32 0.0, %v1717
    %v1719 = vpop.f32.mrb[0].mxu0
    %v1720 = vadd.f32 0.0, %v1719
    %1721 = vmatprep.mubr.bf16.mxu0 0
    %1722 = vmatmul.mubr.bf16.gmra.mrb[0].mxu0 %v1447
    %v1723 = vpop.f32.mrb[0].mxu0
    %v1724 = vadd.f32 0.0, %v1723
    %v1725 = vpop.f32.mrb[0].mxu0
    %v1726 = vadd.f32 0.0, %v1725
    %v1727 = vpop.f32.mrb[0].mxu0
    %v1728 = vadd.f32 0.0, %v1727
    %v1729 = vpop.f32.mrb[0].mxu0
    %v1730 = vadd.f32 0.0, %v1729
    %1731 = vmatprep.mubr.bf16.mxu0 0
    %1732 = vmatmul.mubr.bf16.gmra.mrb[0].mxu0 %v1448
    %v1733 = vpop.f32.mrb[0].mxu0
    %v1734 = vadd.f32 0.0, %v1733
    %v1735 = vpop.f32.mrb[0].mxu0
    %v1736 = vadd.f32 0.0, %v1735
    %v1737 = vpop.f32.mrb[0].mxu0
    %v1738 = vadd.f32 0.0, %v1737
    %v1739 = vpop.f32.mrb[0].mxu0
    %v1740 = vadd.f32 0.0, %v1739
    %1741 = vmatprep.mubr.bf16.mxu0 0
    %1742 = vmatmul.mubr.bf16.gmra.mrb[0].mxu0 %v1449
    %v1743 = vpop.f32.mrb[0].mxu0
    %v1744 = vadd.f32 0.0, %v1743
    %v1745 = vpop.f32.mrb[0].mxu0
    %v1746 = vadd.f32 0.0, %v1745
    %v1747 = vpop.f32.mrb[0].mxu0
    %v1748 = vadd.f32 0.0, %v1747
    %v1749 = vpop.f32.mrb[0].mxu0
    %v1750 = vadd.f32 0.0, %v1749
    %1751 = vmatprep.mubr.bf16.mxu0 0
    %1752 = vmatmul.mubr.bf16.gmra.mrb[0].mxu0 %v1450
    %v1753 = vpop.f32.mrb[0].mxu0
    %v1754 = vadd.f32 0.0, %v1753
    %v1755 = vpop.f32.mrb[0].mxu0
    %v1756 = vadd.f32 0.0, %v1755
    %v1757 = vpop.f32.mrb[0].mxu0
    %v1758 = vadd.f32 0.0, %v1757
    %v1759 = vpop.f32.mrb[0].mxu0
    %v1760 = vadd.f32 0.0, %v1759
    %1761 = vmatprep.mubr.bf16.mxu0 0
    %1762 = vmatmul.mubr.bf16.gmra.mrb[0].mxu0 %v1451
    %v1763 = vpop.f32.mrb[0].mxu0
    %v1764 = vadd.f32 0.0, %v1763
    %v1765 = vpop.f32.mrb[0].mxu0
    %v1766 = vadd.f32 0.0, %v1765
    %v1767 = vpop.f32.mrb[0].mxu0
    %v1768 = vadd.f32 0.0, %v1767
    %v1769 = vpop.f32.mrb[0].mxu0
    %v1770 = vadd.f32 0.0, %v1769
    %1771 = vmatprep.mubr.bf16.mxu0 0
    %1772 = vmatmul.mubr.bf16.gmra.mrb[0].mxu0 %v1452
    %v1773 = vpop.f32.mrb[0].mxu0
    %v1774 = vadd.f32 0.0, %v1773
    %v1775 = vpop.f32.mrb[0].mxu0
    %v1776 = vadd.f32 0.0, %v1775
    %v1777 = vpop.f32.mrb[0].mxu0
    %v1778 = vadd.f32 0.0, %v1777
    %v1779 = vpop.f32.mrb[0].mxu0
    %v1780 = vadd.f32 0.0, %v1779
    %1781 = vdwg.mxu0
    %1782 = vmatprep.subr.bf16.mxu0 %v1592
    %1783 = vmatpush1.bf16.msra.mxu0 %v1591
    %1784 = vmatprep.subr.bf16.mxu0 %v1597
    %1785 = vmatpush1.bf16.msra.mxu0 %v1596
    %1786 = vmatprep.subr.bf16.mxu0 %v1602
    %1787 = vmatpush1.bf16.msra.mxu0 %v1601
    %1788 = vmatprep.subr.bf16.mxu0 %v1607
    %1789 = vmatpush1.bf16.msra.mxu0 %v1606
    %1790 = vmatprep.subr.bf16.mxu0 %v1612
    %1791 = vmatpush1.bf16.msra.mxu0 %v1611
    %1792 = vmatprep.subr.bf16.mxu0 %v1617
    %1793 = vmatpush1.bf16.msra.mxu0 %v1616
    %1794 = vmatprep.subr.bf16.mxu0 %v1622
    %1795 = vmatpush1.bf16.msra.mxu0 %v1621
    %1796 = vmatprep.subr.bf16.mxu0 %v1627
    %1797 = vmatpush1.bf16.msra.mxu0 %v1626
    %1798 = vmatprep.subr.bf16.mxu0 0
    %1799 = vmatpush1.bf16.msra.mxu0 0
    %1800 = vmatprep.subr.bf16.mxu0 0
    %1801 = vmatpush1.bf16.msra.mxu0 0
    %1802 = vmatprep.subr.bf16.mxu0 0
    %1803 = vmatpush1.bf16.msra.mxu0 0
    %1804 = vmatprep.subr.bf16.mxu0 0
    %1805 = vmatpush1.bf16.msra.mxu0 0
    %1806 = vmatprep.subr.bf16.mxu0 0
    %1807 = vmatpush1.bf16.msra.mxu0 0
    %1808 = vmatprep.subr.bf16.mxu0 0
    %1809 = vmatpush1.bf16.msra.mxu0 0
    %1810 = vmatprep.subr.bf16.mxu0 0
    %1811 = vmatpush1.bf16.msra.mxu0 0
    %1812 = vmatprep.subr.bf16.mxu0 0
    %1813 = vmatpush1.bf16.msra.mxu0 0
    %1814 = vmatprep.mubr.bf16.mxu0 0
    %1815 = vmatmul.mubr.bf16.gmra.mrb[0].mxu0 %v1445
    %v1816 = vpop.f32.mrb[0].mxu0
    %v1817 = vadd.f32 0.0, %v1816
    %v1818 = vpop.f32.mrb[0].mxu0
    %v1819 = vadd.f32 0.0, %v1818
    %v1820 = vpop.f32.mrb[0].mxu0
    %v1821 = vadd.f32 0.0, %v1820
    %v1822 = vpop.f32.mrb[0].mxu0
    %v1823 = vadd.f32 0.0, %v1822
    %1824 = vmatprep.mubr.bf16.mxu0 0
    %1825 = vmatmul.mubr.bf16.gmra.mrb[0].mxu0 %v1446
    %v1826 = vpop.f32.mrb[0].mxu0
    %v1827 = vadd.f32 0.0, %v1826
    %v1828 = vpop.f32.mrb[0].mxu0
    %v1829 = vadd.f32 0.0, %v1828
    %v1830 = vpop.f32.mrb[0].mxu0
    %v1831 = vadd.f32 0.0, %v1830
    %v1832 = vpop.f32.mrb[0].mxu0
    %v1833 = vadd.f32 0.0, %v1832
    %1834 = vmatprep.mubr.bf16.mxu0 0
    %1835 = vmatmul.mubr.bf16.gmra.mrb[0].mxu0 %v1447
    %v1836 = vpop.f32.mrb[0].mxu0
    %v1837 = vadd.f32 0.0, %v1836
    %v1838 = vpop.f32.mrb[0].mxu0
    %v1839 = vadd.f32 0.0, %v1838
    %v1840 = vpop.f32.mrb[0].mxu0
    %v1841 = vadd.f32 0.0, %v1840
    %v1842 = vpop.f32.mrb[0].mxu0
    %v1843 = vadd.f32 0.0, %v1842
    %1844 = vmatprep.mubr.bf16.mxu0 0
    %1845 = vmatmul.mubr.bf16.gmra.mrb[0].mxu0 %v1448
    %v1846 = vpop.f32.mrb[0].mxu0
    %v1847 = vadd.f32 0.0, %v1846
    %v1848 = vpop.f32.mrb[0].mxu0
    %v1849 = vadd.f32 0.0, %v1848
    %v1850 = vpop.f32.mrb[0].mxu0
    %v1851 = vadd.f32 0.0, %v1850
    %v1852 = vpop.f32.mrb[0].mxu0
    %v1853 = vadd.f32 0.0, %v1852
    %1854 = vmatprep.mubr.bf16.mxu0 0
    %1855 = vmatmul.mubr.bf16.gmra.mrb[0].mxu0 %v1449
    %v1856 = vpop.f32.mrb[0].mxu0
    %v1857 = vadd.f32 0.0, %v1856
    %v1858 = vpop.f32.mrb[0].mxu0
    %v1859 = vadd.f32 0.0, %v1858
    %v1860 = vpop.f32.mrb[0].mxu0
    %v1861 = vadd.f32 0.0, %v1860
    %v1862 = vpop.f32.mrb[0].mxu0
    %v1863 = vadd.f32 0.0, %v1862
    %1864 = vmatprep.mubr.bf16.mxu0 0
    %1865 = vmatmul.mubr.bf16.gmra.mrb[0].mxu0 %v1450
    %v1866 = vpop.f32.mrb[0].mxu0
    %v1867 = vadd.f32 0.0, %v1866
    %v1868 = vpop.f32.mrb[0].mxu0
    %v1869 = vadd.f32 0.0, %v1868
    %v1870 = vpop.f32.mrb[0].mxu0
    %v1871 = vadd.f32 0.0, %v1870
    %v1872 = vpop.f32.mrb[0].mxu0
    %v1873 = vadd.f32 0.0, %v1872
    %1874 = vmatprep.mubr.bf16.mxu0 0
    %1875 = vmatmul.mubr.bf16.gmra.mrb[0].mxu0 %v1451
    %v1876 = vpop.f32.mrb[0].mxu0
    %v1877 = vadd.f32 0.0, %v1876
    %v1878 = vpop.f32.mrb[0].mxu0
    %v1879 = vadd.f32 0.0, %v1878
    %v1880 = vpop.f32.mrb[0].mxu0
    %v1881 = vadd.f32 0.0, %v1880
    %v1882 = vpop.f32.mrb[0].mxu0
    %v1883 = vadd.f32 0.0, %v1882
    %1884 = vmatprep.mubr.bf16.mxu0 0
    %1885 = vmatmul.mubr.bf16.gmra.mrb[0].mxu0 %v1452
    %v1886 = vpop.f32.mrb[0].mxu0
    %v1887 = vadd.f32 0.0, %v1886
    %v1888 = vpop.f32.mrb[0].mxu0
    %v1889 = vadd.f32 0.0, %v1888
    %v1890 = vpop.f32.mrb[0].mxu0
    %v1891 = vadd.f32 0.0, %v1890
    %v1892 = vpop.f32.mrb[0].mxu0
    %v1893 = vadd.f32 0.0, %v1892
    %1894 = vdwg.mxu0
    %1895 = vmatprep.subr.bf16.mxu0 0
    %1896 = vmatpush1.bf16.msra.mxu0 %v1593
    %1897 = vmatprep.subr.bf16.mxu0 0
    %1898 = vmatpush1.bf16.msra.mxu0 %v1598
    %1899 = vmatprep.subr.bf16.mxu0 0
    %1900 = vmatpush1.bf16.msra.mxu0 %v1603
    %1901 = vmatprep.subr.bf16.mxu0 0
    %1902 = vmatpush1.bf16.msra.mxu0 %v1608
    %1903 = vmatprep.subr.bf16.mxu0 0
    %1904 = vmatpush1.bf16.msra.mxu0 %v1613
    %1905 = vmatprep.subr.bf16.mxu0 0
    %1906 = vmatpush1.bf16.msra.mxu0 %v1618
    %1907 = vmatprep.subr.bf16.mxu0 0
    %1908 = vmatpush1.bf16.msra.mxu0 %v1623
    %1909 = vmatprep.subr.bf16.mxu0 0
    %1910 = vmatpush1.bf16.msra.mxu0 %v1628
    %1911 = vmatprep.subr.bf16.mxu0 0
    %1912 = vmatpush1.bf16.msra.mxu0 0
    %1913 = vmatprep.subr.bf16.mxu0 0
    %1914 = vmatpush1.bf16.msra.mxu0 0
    %1915 = vmatprep.subr.bf16.mxu0 0
    %1916 = vmatpush1.bf16.msra.mxu0 0
    %1917 = vmatprep.subr.bf16.mxu0 0
    %1918 = vmatpush1.bf16.msra.mxu0 0
    %1919 = vmatprep.subr.bf16.mxu0 0
    %1920 = vmatpush1.bf16.msra.mxu0 0
    %1921 = vmatprep.subr.bf16.mxu0 0
    %1922 = vmatpush1.bf16.msra.mxu0 0
    %1923 = vmatprep.subr.bf16.mxu0 0
    %1924 = vmatpush1.bf16.msra.mxu0 0
    %1925 = vmatprep.subr.bf16.mxu0 0
    %1926 = vmatpush1.bf16.msra.mxu0 0
    %1927 = vmatprep.mubr.bf16.mxu0 0
    %1928 = vmatmul.mubr.bf16.gmra.mrb[0].mxu0 %v1445
    %v1929 = vpop.f32.mrb[0].mxu0
    %v1930 = vadd.f32 0.0, %v1929
    %v1931 = vpop.f32.mrb[0].mxu0
    %v1932 = vpop.f32.mrb[0].mxu0
    %v1933 = vadd.f32 0.0, %v1932
    %v1934 = vpop.f32.mrb[0].mxu0
    %1935 = vmatprep.mubr.bf16.mxu0 0
    %1936 = vmatmul.mubr.bf16.gmra.mrb[0].mxu0 %v1446
    %v1937 = vpop.f32.mrb[0].mxu0
    %v1938 = vadd.f32 0.0, %v1937
    %v1939 = vpop.f32.mrb[0].mxu0
    %v1940 = vpop.f32.mrb[0].mxu0
    %v1941 = vadd.f32 0.0, %v1940
    %v1942 = vpop.f32.mrb[0].mxu0
    %1943 = vmatprep.mubr.bf16.mxu0 0
    %1944 = vmatmul.mubr.bf16.gmra.mrb[0].mxu0 %v1447
    %v1945 = vpop.f32.mrb[0].mxu0
    %v1946 = vadd.f32 0.0, %v1945
    %v1947 = vpop.f32.mrb[0].mxu0
    %v1948 = vpop.f32.mrb[0].mxu0
    %v1949 = vadd.f32 0.0, %v1948
    %v1950 = vpop.f32.mrb[0].mxu0
    %1951 = vmatprep.mubr.bf16.mxu0 0
    %1952 = vmatmul.mubr.bf16.gmra.mrb[0].mxu0 %v1448
    %v1953 = vpop.f32.mrb[0].mxu0
    %v1954 = vadd.f32 0.0, %v1953
    %v1955 = vpop.f32.mrb[0].mxu0
    %v1956 = vpop.f32.mrb[0].mxu0
    %v1957 = vadd.f32 0.0, %v1956
    %v1958 = vpop.f32.mrb[0].mxu0
    %1959 = vmatprep.mubr.bf16.mxu0 0
    %1960 = vmatmul.mubr.bf16.gmra.mrb[0].mxu0 %v1449
    %v1961 = vpop.f32.mrb[0].mxu0
    %v1962 = vadd.f32 0.0, %v1961
    %v1963 = vpop.f32.mrb[0].mxu0
    %v1964 = vpop.f32.mrb[0].mxu0
    %v1965 = vadd.f32 0.0, %v1964
    %v1966 = vpop.f32.mrb[0].mxu0
    %1967 = vmatprep.mubr.bf16.mxu0 0
    %1968 = vmatmul.mubr.bf16.gmra.mrb[0].mxu0 %v1450
    %v1969 = vpop.f32.mrb[0].mxu0
    %v1970 = vadd.f32 0.0, %v1969
    %v1971 = vpop.f32.mrb[0].mxu0
    %v1972 = vpop.f32.mrb[0].mxu0
    %v1973 = vadd.f32 0.0, %v1972
    %v1974 = vpop.f32.mrb[0].mxu0
    %1975 = vmatprep.mubr.bf16.mxu0 0
    %1976 = vmatmul.mubr.bf16.gmra.mrb[0].mxu0 %v1451
    %v1977 = vpop.f32.mrb[0].mxu0
    %v1978 = vadd.f32 0.0, %v1977
    %v1979 = vpop.f32.mrb[0].mxu0
    %v1980 = vpop.f32.mrb[0].mxu0
    %v1981 = vadd.f32 0.0, %v1980
    %v1982 = vpop.f32.mrb[0].mxu0
    %1983 = vmatprep.mubr.bf16.mxu0 0
    %1984 = vmatmul.mubr.bf16.gmra.mrb[0].mxu0 %v1452
    %v1985 = vpop.f32.mrb[0].mxu0
    %v1986 = vadd.f32 0.0, %v1985
    %v1987 = vpop.f32.mrb[0].mxu0
    %v1988 = vpop.f32.mrb[0].mxu0
    %v1989 = vadd.f32 0.0, %v1988
    %v1990 = vpop.f32.mrb[0].mxu0
    %1991 = vdwg.mxu0
    %v1992 = vadd.f32 %v1061, %v1704
    %v1993 = vadd.f32 %v1063, %v1706
    %v1994 = vadd.f32 %v1174, %v1817
    %v1995 = vadd.f32 %v1176, %v1819
    %v1996 = vadd.f32 %v1287, %v1930
    %v1997 = vadd.f32 %v1065, %v1708
    %v1998 = vadd.f32 %v1067, %v1710
    %v1999 = vadd.f32 %v1178, %v1821
    %v2000 = vadd.f32 %v1180, %v1823
    %v2001 = vadd.f32 %v1290, %v1933
    %v2002 = vadd.f32 %v1071, %v1714
    %v2003 = vadd.f32 %v1073, %v1716
    %v2004 = vadd.f32 %v1184, %v1827
    %v2005 = vadd.f32 %v1186, %v1829
    %v2006 = vadd.f32 %v1295, %v1938
    %v2007 = vadd.f32 %v1075, %v1718
    %v2008 = vadd.f32 %v1077, %v1720
    %v2009 = vadd.f32 %v1188, %v1831
    %v2010 = vadd.f32 %v1190, %v1833
    %v2011 = vadd.f32 %v1298, %v1941
    %v2012 = vadd.f32 %v1081, %v1724
    %v2013 = vadd.f32 %v1083, %v1726
    %v2014 = vadd.f32 %v1194, %v1837
    %v2015 = vadd.f32 %v1196, %v1839
    %v2016 = vadd.f32 %v1303, %v1946
    %v2017 = vadd.f32 %v1085, %v1728
    %v2018 = vadd.f32 %v1087, %v1730
    %v2019 = vadd.f32 %v1198, %v1841
    %v2020 = vadd.f32 %v1200, %v1843
    %v2021 = vadd.f32 %v1306, %v1949
    %v2022 = vadd.f32 %v1091, %v1734
    %v2023 = vadd.f32 %v1093, %v1736
    %v2024 = vadd.f32 %v1204, %v1847
    %v2025 = vadd.f32 %v1206, %v1849
    %v2026 = vadd.f32 %v1311, %v1954
    %v2027 = vadd.f32 %v1095, %v1738
    %v2028 = vadd.f32 %v1097, %v1740
    %v2029 = vadd.f32 %v1208, %v1851
    %v2030 = vadd.f32 %v1210, %v1853
    %v2031 = vadd.f32 %v1314, %v1957
    %v2032 = vadd.f32 %v1101, %v1744
    %v2033 = vadd.f32 %v1103, %v1746
    %v2034 = vadd.f32 %v1214, %v1857
    %v2035 = vadd.f32 %v1216, %v1859
    %v2036 = vadd.f32 %v1319, %v1962
    %v2037 = vadd.f32 %v1105, %v1748
    %v2038 = vadd.f32 %v1107, %v1750
    %v2039 = vadd.f32 %v1218, %v1861
    %v2040 = vadd.f32 %v1220, %v1863
    %v2041 = vadd.f32 %v1322, %v1965
    %v2042 = vadd.f32 %v1111, %v1754
    %v2043 = vadd.f32 %v1113, %v1756
    %v2044 = vadd.f32 %v1224, %v1867
    %v2045 = vadd.f32 %v1226, %v1869
    %v2046 = vadd.f32 %v1327, %v1970
    %v2047 = vadd.f32 %v1115, %v1758
    %v2048 = vadd.f32 %v1117, %v1760
    %v2049 = vadd.f32 %v1228, %v1871
    %v2050 = vadd.f32 %v1230, %v1873
    %v2051 = vadd.f32 %v1330, %v1973
    %v2052 = vadd.f32 %v1121, %v1764
    %v2053 = vadd.f32 %v1123, %v1766
    %v2054 = vadd.f32 %v1234, %v1877
    %v2055 = vadd.f32 %v1236, %v1879
    %v2056 = vadd.f32 %v1335, %v1978
    %v2057 = vadd.f32 %v1125, %v1768
    %v2058 = vadd.f32 %v1127, %v1770
    %v2059 = vadd.f32 %v1238, %v1881
    %v2060 = vadd.f32 %v1240, %v1883
    %v2061 = vadd.f32 %v1338, %v1981
    %v2062 = vadd.f32 %v1131, %v1774
    %v2063 = vadd.f32 %v1133, %v1776
    %v2064 = vadd.f32 %v1244, %v1887
    %v2065 = vadd.f32 %v1246, %v1889
    %v2066 = vadd.f32 %v1343, %v1986
    %v2067 = vadd.f32 %v1135, %v1778
    %v2068 = vadd.f32 %v1137, %v1780
    %v2069 = vadd.f32 %v1248, %v1891
    %v2070 = vadd.f32 %v1250, %v1893
    %v2071 = vadd.f32 %v1346, %v1989
    %v2072 = vld [vmem:[%s8] sm:$0x1f]
    %v2074 = vlaneseq
    %v2075 = vshrl.u32 %v2074, 7
    %v2076 = vsub.s32 0, %v2075
    %v2077 = vrot.slane %v2072, %v2076
    %v2078 = vlaneseq
    %v2079 = vshrl.u32 %v2078, 7
    %v2080 = vsub.s32 1, %v2079
    %v2081 = vrot.slane %v2072, %v2080
    %v2082 = vlaneseq
    %v2083 = vshrl.u32 %v2082, 7
    %v2084 = vsub.s32 2, %v2083
    %v2085 = vrot.slane %v2072, %v2084
    %v2086 = vlaneseq
    %v2087 = vshrl.u32 %v2086, 7
    %v2088 = vsub.s32 3, %v2087
    %v2089 = vrot.slane %v2072, %v2088
    %v2090 = vlaneseq
    %v2091 = vshrl.u32 %v2090, 7
    %v2092 = vsub.s32 4, %v2091
    %v2093 = vrot.slane %v2072, %v2092
    %v2099 = vadd.f32 %v1992, %v2077
    %v2100 = vadd.f32 %v1993, %v2081
    %v2101 = vadd.f32 %v1994, %v2085
    %v2102 = vadd.f32 %v1995, %v2089
    %v2103 = vadd.f32 %v1996, %v2093
    %v2104 = vadd.f32 %v1997, %v2077
    %v2105 = vadd.f32 %v1998, %v2081
    %v2106 = vadd.f32 %v1999, %v2085
    %v2107 = vadd.f32 %v2000, %v2089
    %v2108 = vadd.f32 %v2001, %v2093
    %v2109 = vadd.f32 %v2002, %v2077
    %v2110 = vadd.f32 %v2003, %v2081
    %v2111 = vadd.f32 %v2004, %v2085
    %v2112 = vadd.f32 %v2005, %v2089
    %v2113 = vadd.f32 %v2006, %v2093
    %v2114 = vadd.f32 %v2007, %v2077
    %v2115 = vadd.f32 %v2008, %v2081
    %v2116 = vadd.f32 %v2009, %v2085
    %v2117 = vadd.f32 %v2010, %v2089
    %v2118 = vadd.f32 %v2011, %v2093
    %v2119 = vadd.f32 %v2012, %v2077
    %v2120 = vadd.f32 %v2013, %v2081
    %v2121 = vadd.f32 %v2014, %v2085
    %v2122 = vadd.f32 %v2015, %v2089
    %v2123 = vadd.f32 %v2016, %v2093
    %v2124 = vadd.f32 %v2017, %v2077
    %v2125 = vadd.f32 %v2018, %v2081
    %v2126 = vadd.f32 %v2019, %v2085
    %v2127 = vadd.f32 %v2020, %v2089
    %v2128 = vadd.f32 %v2021, %v2093
    %v2129 = vadd.f32 %v2022, %v2077
    %v2130 = vadd.f32 %v2023, %v2081
    %v2131 = vadd.f32 %v2024, %v2085
    %v2132 = vadd.f32 %v2025, %v2089
    %v2133 = vadd.f32 %v2026, %v2093
    %v2134 = vadd.f32 %v2027, %v2077
    %v2135 = vadd.f32 %v2028, %v2081
    %v2136 = vadd.f32 %v2029, %v2085
    %v2137 = vadd.f32 %v2030, %v2089
    %v2138 = vadd.f32 %v2031, %v2093
    %v2139 = vadd.f32 %v2032, %v2077
    %v2140 = vadd.f32 %v2033, %v2081
    %v2141 = vadd.f32 %v2034, %v2085
    %v2142 = vadd.f32 %v2035, %v2089
    %v2143 = vadd.f32 %v2036, %v2093
    %v2144 = vadd.f32 %v2037, %v2077
    %v2145 = vadd.f32 %v2038, %v2081
    %v2146 = vadd.f32 %v2039, %v2085
    %v2147 = vadd.f32 %v2040, %v2089
    %v2148 = vadd.f32 %v2041, %v2093
    %v2149 = vadd.f32 %v2042, %v2077
    %v2150 = vadd.f32 %v2043, %v2081
    %v2151 = vadd.f32 %v2044, %v2085
    %v2152 = vadd.f32 %v2045, %v2089
    %v2153 = vadd.f32 %v2046, %v2093
    %v2154 = vadd.f32 %v2047, %v2077
    %v2155 = vadd.f32 %v2048, %v2081
    %v2156 = vadd.f32 %v2049, %v2085
    %v2157 = vadd.f32 %v2050, %v2089
    %v2158 = vadd.f32 %v2051, %v2093
    %v2159 = vadd.f32 %v2052, %v2077
    %v2160 = vadd.f32 %v2053, %v2081
    %v2161 = vadd.f32 %v2054, %v2085
    %v2162 = vadd.f32 %v2055, %v2089
    %v2163 = vadd.f32 %v2056, %v2093
    %v2164 = vadd.f32 %v2057, %v2077
    %v2165 = vadd.f32 %v2058, %v2081
    %v2166 = vadd.f32 %v2059, %v2085
    %v2167 = vadd.f32 %v2060, %v2089
    %v2168 = vadd.f32 %v2061, %v2093
    %v2169 = vadd.f32 %v2062, %v2077
    %v2170 = vadd.f32 %v2063, %v2081
    %v2171 = vadd.f32 %v2064, %v2085
    %v2172 = vadd.f32 %v2065, %v2089
    %v2173 = vadd.f32 %v2066, %v2093
    %v2174 = vadd.f32 %v2067, %v2077
    %v2175 = vadd.f32 %v2068, %v2081
    %v2176 = vadd.f32 %v2069, %v2085
    %v2177 = vadd.f32 %v2070, %v2089
    %v2178 = vadd.f32 %v2071, %v2093
    %v2179 = vmul.f32 %v2099, 0.5
    %v2180 = vmul.f32 %v2104, 0.5
    %v2181 = vmul.f32 %v2109, 0.5
    %v2182 = vmul.f32 %v2114, 0.5
    %v2183 = vmul.f32 %v2119, 0.5
    %v2184 = vmul.f32 %v2124, 0.5
    %v2185 = vmul.f32 %v2129, 0.5
    %v2186 = vmul.f32 %v2134, 0.5
    %v2187 = vmul.f32 %v2139, 0.5
    %v2188 = vmul.f32 %v2144, 0.5
    %v2189 = vmul.f32 %v2149, 0.5
    %v2190 = vmul.f32 %v2154, 0.5
    %v2191 = vmul.f32 %v2159, 0.5
    %v2192 = vmul.f32 %v2164, 0.5
    %v2193 = vmul.f32 %v2169, 0.5
    %v2194 = vmul.f32 %v2174, 0.5
    %v2195 = vtanh.pop %v2179
    %v2196 = vtanh.pop %v2180
    %v2197 = vtanh.pop %v2181
    %v2198 = vtanh.pop %v2182
    %v2199 = vtanh.pop %v2183
    %v2200 = vtanh.pop %v2184
    %v2201 = vtanh.pop %v2185
    %v2202 = vtanh.pop %v2186
    %v2203 = vtanh.pop %v2187
    %v2204 = vtanh.pop %v2188
    %v2205 = vtanh.pop %v2189
    %v2206 = vtanh.pop %v2190
    %v2207 = vtanh.pop %v2191
    %v2208 = vtanh.pop %v2192
    %v2209 = vtanh.pop %v2193
    %v2210 = vtanh.pop %v2194
    %v2211 = vmul.f32 %v2195, 0.5
    %v2212 = vmul.f32 %v2196, 0.5
    %v2213 = vmul.f32 %v2197, 0.5
    %v2214 = vmul.f32 %v2198, 0.5
    %v2215 = vmul.f32 %v2199, 0.5
    %v2216 = vmul.f32 %v2200, 0.5
    %v2217 = vmul.f32 %v2201, 0.5
    %v2218 = vmul.f32 %v2202, 0.5
    %v2219 = vmul.f32 %v2203, 0.5
    %v2220 = vmul.f32 %v2204, 0.5
    %v2221 = vmul.f32 %v2205, 0.5
    %v2222 = vmul.f32 %v2206, 0.5
    %v2223 = vmul.f32 %v2207, 0.5
    %v2224 = vmul.f32 %v2208, 0.5
    %v2225 = vmul.f32 %v2209, 0.5
    %v2226 = vmul.f32 %v2210, 0.5
    %v2227 = vadd.f32 %v2211, 0.5
    %v2228 = vadd.f32 %v2212, 0.5
    %v2229 = vadd.f32 %v2213, 0.5
    %v2230 = vadd.f32 %v2214, 0.5
    %v2231 = vadd.f32 %v2215, 0.5
    %v2232 = vadd.f32 %v2216, 0.5
    %v2233 = vadd.f32 %v2217, 0.5
    %v2234 = vadd.f32 %v2218, 0.5
    %v2235 = vadd.f32 %v2219, 0.5
    %v2236 = vadd.f32 %v2220, 0.5
    %v2237 = vadd.f32 %v2221, 0.5
    %v2238 = vadd.f32 %v2222, 0.5
    %v2239 = vadd.f32 %v2223, 0.5
    %v2240 = vadd.f32 %v2224, 0.5
    %v2241 = vadd.f32 %v2225, 0.5
    %v2242 = vadd.f32 %v2226, 0.5
    %v2243 = vmul.f32 %v2100, 0.5
    %v2244 = vmul.f32 %v2105, 0.5
    %v2245 = vmul.f32 %v2110, 0.5
    %v2246 = vmul.f32 %v2115, 0.5
    %v2247 = vmul.f32 %v2120, 0.5
    %v2248 = vmul.f32 %v2125, 0.5
    %v2249 = vmul.f32 %v2130, 0.5
    %v2250 = vmul.f32 %v2135, 0.5
    %v2251 = vmul.f32 %v2140, 0.5
    %v2252 = vmul.f32 %v2145, 0.5
    %v2253 = vmul.f32 %v2150, 0.5
    %v2254 = vmul.f32 %v2155, 0.5
    %v2255 = vmul.f32 %v2160, 0.5
    %v2256 = vmul.f32 %v2165, 0.5
    %v2257 = vmul.f32 %v2170, 0.5
    %v2258 = vmul.f32 %v2175, 0.5
    %v2259 = vtanh.pop %v2243
    %v2260 = vtanh.pop %v2244
    %v2261 = vtanh.pop %v2245
    %v2262 = vtanh.pop %v2246
    %v2263 = vtanh.pop %v2247
    %v2264 = vtanh.pop %v2248
    %v2265 = vtanh.pop %v2249
    %v2266 = vtanh.pop %v2250
    %v2267 = vtanh.pop %v2251
    %v2268 = vtanh.pop %v2252
    %v2269 = vtanh.pop %v2253
    %v2270 = vtanh.pop %v2254
    %v2271 = vtanh.pop %v2255
    %v2272 = vtanh.pop %v2256
    %v2273 = vtanh.pop %v2257
    %v2274 = vtanh.pop %v2258
    %v2275 = vmul.f32 %v2259, 0.5
    %v2276 = vmul.f32 %v2260, 0.5
    %v2277 = vmul.f32 %v2261, 0.5
    %v2278 = vmul.f32 %v2262, 0.5
    %v2279 = vmul.f32 %v2263, 0.5
    %v2280 = vmul.f32 %v2264, 0.5
    %v2281 = vmul.f32 %v2265, 0.5
    %v2282 = vmul.f32 %v2266, 0.5
    %v2283 = vmul.f32 %v2267, 0.5
    %v2284 = vmul.f32 %v2268, 0.5
    %v2285 = vmul.f32 %v2269, 0.5
    %v2286 = vmul.f32 %v2270, 0.5
    %v2287 = vmul.f32 %v2271, 0.5
    %v2288 = vmul.f32 %v2272, 0.5
    %v2289 = vmul.f32 %v2273, 0.5
    %v2290 = vmul.f32 %v2274, 0.5
    %v2291 = vadd.f32 %v2275, 0.5
    %v2292 = vadd.f32 %v2276, 0.5
    %v2293 = vadd.f32 %v2277, 0.5
    %v2294 = vadd.f32 %v2278, 0.5
    %v2295 = vadd.f32 %v2279, 0.5
    %v2296 = vadd.f32 %v2280, 0.5
    %v2297 = vadd.f32 %v2281, 0.5
    %v2298 = vadd.f32 %v2282, 0.5
    %v2299 = vadd.f32 %v2283, 0.5
    %v2300 = vadd.f32 %v2284, 0.5
    %v2301 = vadd.f32 %v2285, 0.5
    %v2302 = vadd.f32 %v2286, 0.5
    %v2303 = vadd.f32 %v2287, 0.5
    %v2304 = vadd.f32 %v2288, 0.5
    %v2305 = vadd.f32 %v2289, 0.5
    %v2306 = vadd.f32 %v2290, 0.5
    %v2307 = vtanh.pop %v2101
    %v2308 = vtanh.pop %v2106
    %v2309 = vtanh.pop %v2111
    %v2310 = vtanh.pop %v2116
    %v2311 = vtanh.pop %v2121
    %v2312 = vtanh.pop %v2126
    %v2313 = vtanh.pop %v2131
    %v2314 = vtanh.pop %v2136
    %v2315 = vtanh.pop %v2141
    %v2316 = vtanh.pop %v2146
    %v2317 = vtanh.pop %v2151
    %v2318 = vtanh.pop %v2156
    %v2319 = vtanh.pop %v2161
    %v2320 = vtanh.pop %v2166
    %v2321 = vtanh.pop %v2171
    %v2322 = vtanh.pop %v2176
    %v2323 = vmul.f32 %v2102, 0.5
    %v2324 = vmul.f32 %v2107, 0.5
    %v2325 = vmul.f32 %v2112, 0.5
    %v2326 = vmul.f32 %v2117, 0.5
    %v2327 = vmul.f32 %v2122, 0.5
    %v2328 = vmul.f32 %v2127, 0.5
    %v2329 = vmul.f32 %v2132, 0.5
    %v2330 = vmul.f32 %v2137, 0.5
    %v2331 = vmul.f32 %v2142, 0.5
    %v2332 = vmul.f32 %v2147, 0.5
    %v2333 = vmul.f32 %v2152, 0.5
    %v2334 = vmul.f32 %v2157, 0.5
    %v2335 = vmul.f32 %v2162, 0.5
    %v2336 = vmul.f32 %v2167, 0.5
    %v2337 = vmul.f32 %v2172, 0.5
    %v2338 = vmul.f32 %v2177, 0.5
    %v2339 = vtanh.pop %v2323
    %v2340 = vtanh.pop %v2324
    %v2341 = vtanh.pop %v2325
    %v2342 = vtanh.pop %v2326
    %v2343 = vtanh.pop %v2327
    %v2344 = vtanh.pop %v2328
    %v2345 = vtanh.pop %v2329
    %v2346 = vtanh.pop %v2330
    %v2347 = vtanh.pop %v2331
    %v2348 = vtanh.pop %v2332
    %v2349 = vtanh.pop %v2333
    %v2350 = vtanh.pop %v2334
    %v2351 = vtanh.pop %v2335
    %v2352 = vtanh.pop %v2336
    %v2353 = vtanh.pop %v2337
    %v2354 = vtanh.pop %v2338
    %v2355 = vmul.f32 %v2339, 0.5
    %v2356 = vmul.f32 %v2340, 0.5
    %v2357 = vmul.f32 %v2341, 0.5
    %v2358 = vmul.f32 %v2342, 0.5
    %v2359 = vmul.f32 %v2343, 0.5
    %v2360 = vmul.f32 %v2344, 0.5
    %v2361 = vmul.f32 %v2345, 0.5
    %v2362 = vmul.f32 %v2346, 0.5
    %v2363 = vmul.f32 %v2347, 0.5
    %v2364 = vmul.f32 %v2348, 0.5
    %v2365 = vmul.f32 %v2349, 0.5
    %v2366 = vmul.f32 %v2350, 0.5
    %v2367 = vmul.f32 %v2351, 0.5
    %v2368 = vmul.f32 %v2352, 0.5
    %v2369 = vmul.f32 %v2353, 0.5
    %v2370 = vmul.f32 %v2354, 0.5
    %v2371 = vadd.f32 %v2355, 0.5
    %v2372 = vadd.f32 %v2356, 0.5
    %v2373 = vadd.f32 %v2357, 0.5
    %v2374 = vadd.f32 %v2358, 0.5
    %v2375 = vadd.f32 %v2359, 0.5
    %v2376 = vadd.f32 %v2360, 0.5
    %v2377 = vadd.f32 %v2361, 0.5
    %v2378 = vadd.f32 %v2362, 0.5
    %v2379 = vadd.f32 %v2363, 0.5
    %v2380 = vadd.f32 %v2364, 0.5
    %v2381 = vadd.f32 %v2365, 0.5
    %v2382 = vadd.f32 %v2366, 0.5
    %v2383 = vadd.f32 %v2367, 0.5
    %v2384 = vadd.f32 %v2368, 0.5
    %v2385 = vadd.f32 %v2369, 0.5
    %v2386 = vadd.f32 %v2370, 0.5
    %v2387 = vmul.f32 %v2103, 0.5
    %v2388 = vmul.f32 %v2108, 0.5
    %v2389 = vmul.f32 %v2113, 0.5
    %v2390 = vmul.f32 %v2118, 0.5
    %v2391 = vmul.f32 %v2123, 0.5
    %v2392 = vmul.f32 %v2128, 0.5
    %v2393 = vmul.f32 %v2133, 0.5
    %v2394 = vmul.f32 %v2138, 0.5
    %v2395 = vmul.f32 %v2143, 0.5
    %v2396 = vmul.f32 %v2148, 0.5
    %v2397 = vmul.f32 %v2153, 0.5
    %v2398 = vmul.f32 %v2158, 0.5
    %v2399 = vmul.f32 %v2163, 0.5
    %v2400 = vmul.f32 %v2168, 0.5
    %v2401 = vmul.f32 %v2173, 0.5
    %v2402 = vmul.f32 %v2178, 0.5
    %v2403 = vtanh.pop %v2387
    %v2404 = vtanh.pop %v2388
    %v2405 = vtanh.pop %v2389
    %v2406 = vtanh.pop %v2390
    %v2407 = vtanh.pop %v2391
    %v2408 = vtanh.pop %v2392
    %v2409 = vtanh.pop %v2393
    %v2410 = vtanh.pop %v2394
    %v2411 = vtanh.pop %v2395
    %v2412 = vtanh.pop %v2396
    %v2413 = vtanh.pop %v2397
    %v2414 = vtanh.pop %v2398
    %v2415 = vtanh.pop %v2399
    %v2416 = vtanh.pop %v2400
    %v2417 = vtanh.pop %v2401
    %v2418 = vtanh.pop %v2402
    %v2419 = vmul.f32 %v2403, 0.5
    %v2420 = vmul.f32 %v2404, 0.5
    %v2421 = vmul.f32 %v2405, 0.5
    %v2422 = vmul.f32 %v2406, 0.5
    %v2423 = vmul.f32 %v2407, 0.5
    %v2424 = vmul.f32 %v2408, 0.5
    %v2425 = vmul.f32 %v2409, 0.5
    %v2426 = vmul.f32 %v2410, 0.5
    %v2427 = vmul.f32 %v2411, 0.5
    %v2428 = vmul.f32 %v2412, 0.5
    %v2429 = vmul.f32 %v2413, 0.5
    %v2430 = vmul.f32 %v2414, 0.5
    %v2431 = vmul.f32 %v2415, 0.5
    %v2432 = vmul.f32 %v2416, 0.5
    %v2433 = vmul.f32 %v2417, 0.5
    %v2434 = vmul.f32 %v2418, 0.5
    %v2435 = vadd.f32 %v2419, 0.5
    %v2436 = vadd.f32 %v2420, 0.5
    %v2437 = vadd.f32 %v2421, 0.5
    %v2438 = vadd.f32 %v2422, 0.5
    %v2439 = vadd.f32 %v2423, 0.5
    %v2440 = vadd.f32 %v2424, 0.5
    %v2441 = vadd.f32 %v2425, 0.5
    %v2442 = vadd.f32 %v2426, 0.5
    %v2443 = vadd.f32 %v2427, 0.5
    %v2444 = vadd.f32 %v2428, 0.5
    %v2445 = vadd.f32 %v2429, 0.5
    %v2446 = vadd.f32 %v2430, 0.5
    %v2447 = vadd.f32 %v2431, 0.5
    %v2448 = vadd.f32 %v2432, 0.5
    %v2449 = vadd.f32 %v2433, 0.5
    %v2450 = vadd.f32 %v2434, 0.5
    %v2451 = vmul.f32 %v2227, %v2307
    %v2452 = vmul.f32 %v2228, %v2308
    %v2453 = vmul.f32 %v2229, %v2309
    %v2454 = vmul.f32 %v2230, %v2310
    %v2455 = vmul.f32 %v2231, %v2311
    %v2456 = vmul.f32 %v2232, %v2312
    %v2457 = vmul.f32 %v2233, %v2313
    %v2458 = vmul.f32 %v2234, %v2314
    %v2459 = vmul.f32 %v2235, %v2315
    %v2460 = vmul.f32 %v2236, %v2316
    %v2461 = vmul.f32 %v2237, %v2317
    %v2462 = vmul.f32 %v2238, %v2318
    %v2463 = vmul.f32 %v2239, %v2319
    %v2464 = vmul.f32 %v2240, %v2320
    %v2465 = vmul.f32 %v2241, %v2321
    %v2466 = vmul.f32 %v2242, %v2322
    %v2467 = vld [vmem:[%s3] sm:$0xff]
    %v2468 = vld [vmem:[%s3 + $0x8] sm:$0xff]
    %v2469 = vld [vmem:[%s3 + $0x10] sm:$0xff]
    %v2470 = vld [vmem:[%s3 + $0x18] sm:$0xff]
    %v2471 = vld [vmem:[%s3 + $0x20] sm:$0xff]
    %v2472 = vld [vmem:[%s3 + $0x28] sm:$0xff]
    %v2473 = vld [vmem:[%s3 + $0x30] sm:$0xff]
    %v2474 = vld [vmem:[%s3 + $0x38] sm:$0xff]
    %v2475 = vld [vmem:[%s3 + $0x40] sm:$0xff]
    %v2476 = vld [vmem:[%s3 + $0x48] sm:$0xff]
    %v2477 = vld [vmem:[%s3 + $0x50] sm:$0xff]
    %v2478 = vld [vmem:[%s3 + $0x58] sm:$0xff]
    %v2479 = vld [vmem:[%s3 + $0x60] sm:$0xff]
    %v2480 = vld [vmem:[%s3 + $0x68] sm:$0xff]
    %v2481 = vld [vmem:[%s3 + $0x70] sm:$0xff]
    %v2482 = vld [vmem:[%s3 + $0x78] sm:$0xff]
    %v2483 = vmul.f32 %v2371, %v2467
    %v2484 = vmul.f32 %v2372, %v2468
    %v2485 = vmul.f32 %v2373, %v2469
    %v2486 = vmul.f32 %v2374, %v2470
    %v2487 = vmul.f32 %v2375, %v2471
    %v2488 = vmul.f32 %v2376, %v2472
    %v2489 = vmul.f32 %v2377, %v2473
    %v2490 = vmul.f32 %v2378, %v2474
    %v2491 = vmul.f32 %v2379, %v2475
    %v2492 = vmul.f32 %v2380, %v2476
    %v2493 = vmul.f32 %v2381, %v2477
    %v2494 = vmul.f32 %v2382, %v2478
    %v2495 = vmul.f32 %v2383, %v2479
    %v2496 = vmul.f32 %v2384, %v2480
    %v2497 = vmul.f32 %v2385, %v2481
    %v2498 = vmul.f32 %v2386, %v2482
    %v2499 = vadd.f32 %v2451, %v2483
    %v2500 = vadd.f32 %v2452, %v2484
    %v2501 = vadd.f32 %v2453, %v2485
    %v2502 = vadd.f32 %v2454, %v2486
    %v2503 = vadd.f32 %v2455, %v2487
    %v2504 = vadd.f32 %v2456, %v2488
    %v2505 = vadd.f32 %v2457, %v2489
    %v2506 = vadd.f32 %v2458, %v2490
    %v2507 = vadd.f32 %v2459, %v2491
    %v2508 = vadd.f32 %v2460, %v2492
    %v2509 = vadd.f32 %v2461, %v2493
    %v2510 = vadd.f32 %v2462, %v2494
    %v2511 = vadd.f32 %v2463, %v2495
    %v2512 = vadd.f32 %v2464, %v2496
    %v2513 = vadd.f32 %v2465, %v2497
    %v2514 = vadd.f32 %v2466, %v2498
    %v2515 = vld [vmem:[%s4] sm:$0xff]
    %v2516 = vld [vmem:[%s4 + $0x8] sm:$0xff]
    %v2517 = vld [vmem:[%s4 + $0x10] sm:$0xff]
    %v2518 = vld [vmem:[%s4 + $0x18] sm:$0xff]
    %v2519 = vld [vmem:[%s4 + $0x20] sm:$0xff]
    %v2520 = vld [vmem:[%s4 + $0x28] sm:$0xff]
    %v2521 = vld [vmem:[%s4 + $0x30] sm:$0xff]
    %v2522 = vld [vmem:[%s4 + $0x38] sm:$0xff]
    %v2523 = vld [vmem:[%s4 + $0x40] sm:$0xff]
    %v2524 = vld [vmem:[%s4 + $0x48] sm:$0xff]
    %v2525 = vld [vmem:[%s4 + $0x50] sm:$0xff]
    %v2526 = vld [vmem:[%s4 + $0x58] sm:$0xff]
    %v2527 = vld [vmem:[%s4 + $0x60] sm:$0xff]
    %v2528 = vld [vmem:[%s4 + $0x68] sm:$0xff]
    %v2529 = vld [vmem:[%s4 + $0x70] sm:$0xff]
    %v2530 = vld [vmem:[%s4 + $0x78] sm:$0xff]
    %v2531 = vmul.f32 %v2435, %v2515
    %v2532 = vmul.f32 %v2436, %v2516
    %v2533 = vmul.f32 %v2437, %v2517
    %v2534 = vmul.f32 %v2438, %v2518
    %v2535 = vmul.f32 %v2439, %v2519
    %v2536 = vmul.f32 %v2440, %v2520
    %v2537 = vmul.f32 %v2441, %v2521
    %v2538 = vmul.f32 %v2442, %v2522
    %v2539 = vmul.f32 %v2443, %v2523
    %v2540 = vmul.f32 %v2444, %v2524
    %v2541 = vmul.f32 %v2445, %v2525
    %v2542 = vmul.f32 %v2446, %v2526
    %v2543 = vmul.f32 %v2447, %v2527
    %v2544 = vmul.f32 %v2448, %v2528
    %v2545 = vmul.f32 %v2449, %v2529
    %v2546 = vmul.f32 %v2450, %v2530
    %v2547 = vadd.f32 %v2499, %v2531
    %v2548 = vadd.f32 %v2500, %v2532
    %v2549 = vadd.f32 %v2501, %v2533
    %v2550 = vadd.f32 %v2502, %v2534
    %v2551 = vadd.f32 %v2503, %v2535
    %v2552 = vadd.f32 %v2504, %v2536
    %v2553 = vadd.f32 %v2505, %v2537
    %v2554 = vadd.f32 %v2506, %v2538
    %v2555 = vadd.f32 %v2507, %v2539
    %v2556 = vadd.f32 %v2508, %v2540
    %v2557 = vadd.f32 %v2509, %v2541
    %v2558 = vadd.f32 %v2510, %v2542
    %v2559 = vadd.f32 %v2511, %v2543
    %v2560 = vadd.f32 %v2512, %v2544
    %v2561 = vadd.f32 %v2513, %v2545
    %v2562 = vadd.f32 %v2514, %v2546
    %v2563 = vtanh.pop %v2547
    %v2564 = vtanh.pop %v2548
    %v2565 = vtanh.pop %v2549
    %v2566 = vtanh.pop %v2550
    %v2567 = vtanh.pop %v2551
    %v2568 = vtanh.pop %v2552
    %v2569 = vtanh.pop %v2553
    %v2570 = vtanh.pop %v2554
    %v2571 = vtanh.pop %v2555
    %v2572 = vtanh.pop %v2556
    %v2573 = vtanh.pop %v2557
    %v2574 = vtanh.pop %v2558
    %v2575 = vtanh.pop %v2559
    %v2576 = vtanh.pop %v2560
    %v2577 = vtanh.pop %v2561
    %v2578 = vtanh.pop %v2562
    %v2579 = vmul.f32 %v2291, %v2563
    %v2580 = vmul.f32 %v2292, %v2564
    %v2581 = vmul.f32 %v2293, %v2565
    %v2582 = vmul.f32 %v2294, %v2566
    %v2583 = vmul.f32 %v2295, %v2567
    %v2584 = vmul.f32 %v2296, %v2568
    %v2585 = vmul.f32 %v2297, %v2569
    %v2586 = vmul.f32 %v2298, %v2570
    %v2587 = vmul.f32 %v2299, %v2571
    %v2588 = vmul.f32 %v2300, %v2572
    %v2589 = vmul.f32 %v2301, %v2573
    %v2590 = vmul.f32 %v2302, %v2574
    %v2591 = vmul.f32 %v2303, %v2575
    %v2592 = vmul.f32 %v2304, %v2576
    %v2593 = vmul.f32 %v2305, %v2577
    %v2594 = vmul.f32 %v2306, %v2578
    %v2595 = vpack.c.bf16 %v2580, %v2579
    %v2596 = vpack.c.bf16 %v2582, %v2581
    %v2597 = vpack.c.bf16 %v2584, %v2583
    %v2598 = vpack.c.bf16 %v2586, %v2585
    %v2599 = vpack.c.bf16 %v2588, %v2587
    %v2600 = vpack.c.bf16 %v2590, %v2589
    %v2601 = vpack.c.bf16 %v2592, %v2591
    %v2602 = vpack.c.bf16 %v2594, %v2593
    %v2611 = vunpack.c.l.b16 %v2595
    %v2612 = vunpack.c.h.b16 %v2595
    %v2613 = vunpack.c.l.b16 %v2596
    %v2614 = vunpack.c.h.b16 %v2596
    %v2615 = vunpack.c.l.b16 %v2597
    %v2616 = vunpack.c.h.b16 %v2597
    %v2617 = vunpack.c.l.b16 %v2598
    %v2618 = vunpack.c.h.b16 %v2598
    %v2619 = vunpack.c.l.b16 %v2599
    %v2620 = vunpack.c.h.b16 %v2599
    %v2621 = vunpack.c.l.b16 %v2600
    %v2622 = vunpack.c.h.b16 %v2600
    %v2623 = vunpack.c.l.b16 %v2601
    %v2624 = vunpack.c.h.b16 %v2601
    %v2625 = vunpack.c.l.b16 %v2602
    %v2626 = vunpack.c.h.b16 %v2602
    %v2627 = vpack.c.b16 %v2611, %v2611
    %v2628 = vpack.c.b16 %v2612, %v2612
    %v2629 = vpack.c.b16 %v2613, %v2613
    %v2630 = vpack.c.b16 %v2614, %v2614
    %v2631 = vpack.c.b16 %v2615, %v2615
    %v2632 = vpack.c.b16 %v2616, %v2616
    %v2633 = vpack.c.b16 %v2617, %v2617
    %v2634 = vpack.c.b16 %v2618, %v2618
    %v2635 = vpack.c.b16 %v2619, %v2619
    %v2636 = vpack.c.b16 %v2620, %v2620
    %v2637 = vpack.c.b16 %v2621, %v2621
    %v2638 = vpack.c.b16 %v2622, %v2622
    %v2639 = vpack.c.b16 %v2623, %v2623
    %v2640 = vpack.c.b16 %v2624, %v2624
    %v2641 = vpack.c.b16 %v2625, %v2625
    %v2642 = vpack.c.b16 %v2626, %v2626
    %2659 = vst [vmem:[%s9] sm:$0xf] %v2627
    %2660 = vst [vmem:[%s9 + $0x4] sm:$0xf] %v2628
    %2661 = vst [vmem:[%s9 + $0x8] sm:$0xf] %v2629
    %2662 = vst [vmem:[%s9 + $0xc] sm:$0xf] %v2630
    %2663 = vst [vmem:[%s9 + $0x10] sm:$0xf] %v2631
    %2664 = vst [vmem:[%s9 + $0x14] sm:$0xf] %v2632
    %2665 = vst [vmem:[%s9 + $0x18] sm:$0xf] %v2633
    %2666 = vst [vmem:[%s9 + $0x1c] sm:$0xf] %v2634
    %2667 = vst [vmem:[%s9 + $0x20] sm:$0xf] %v2635
    %2668 = vst [vmem:[%s9 + $0x24] sm:$0xf] %v2636
    %2669 = vst [vmem:[%s9 + $0x28] sm:$0xf] %v2637
    %2670 = vst [vmem:[%s9 + $0x2c] sm:$0xf] %v2638
    %2671 = vst [vmem:[%s9 + $0x30] sm:$0xf] %v2639
    %2672 = vst [vmem:[%s9 + $0x34] sm:$0xf] %v2640
    %2673 = vst [vmem:[%s9 + $0x38] sm:$0xf] %v2641
    %2674 = vst [vmem:[%s9 + $0x3c] sm:$0xf] %v2642
    %2675 = vst [vmem:[%s10] sm:$0xff] %v2547
    %2676 = vst [vmem:[%s10 + $0x8] sm:$0xff] %v2548
    %2677 = vst [vmem:[%s10 + $0x10] sm:$0xff] %v2549
    %2678 = vst [vmem:[%s10 + $0x18] sm:$0xff] %v2550
    %2679 = vst [vmem:[%s10 + $0x20] sm:$0xff] %v2551
    %2680 = vst [vmem:[%s10 + $0x28] sm:$0xff] %v2552
    %2681 = vst [vmem:[%s10 + $0x30] sm:$0xff] %v2553
    %2682 = vst [vmem:[%s10 + $0x38] sm:$0xff] %v2554
    %2683 = vst [vmem:[%s10 + $0x40] sm:$0xff] %v2555
    %2684 = vst [vmem:[%s10 + $0x48] sm:$0xff] %v2556
    %2685 = vst [vmem:[%s10 + $0x50] sm:$0xff] %v2557
    %2686 = vst [vmem:[%s10 + $0x58] sm:$0xff] %v2558
    %2687 = vst [vmem:[%s10 + $0x60] sm:$0xff] %v2559
    %2688 = vst [vmem:[%s10 + $0x68] sm:$0xff] %v2560
    %2689 = vst [vmem:[%s10 + $0x70] sm:$0xff] %v2561
    %2690 = vst [vmem:[%s10 + $0x78] sm:$0xff] %v2562
    // Predicated region
    $region46: #{_calc_root_jit.1} parent=1 // pred_check
      _
    $region47: #{_calc_root_jit.1} parent=1 // pred_check_branch
      %2692 = sbr.rel (0) target = $region49
    $region48: #{_calc_root_jit.1} parent=1 // pred_region
      _
    $region49: #{_calc_root_jit.1} parent=1 // pred_fallthru
      _
    // Predicated region
    $region50: #{_calc_root_jit.1} parent=1 // pred_check
      _
    $region51: #{_calc_root_jit.1} parent=1 // pred_check_branch
      %2694 = sbr.rel (0) target = $region53
    $region52: #{_calc_root_jit.1} parent=1 // pred_region
      _
    $region53: #{_calc_root_jit.1} parent=1 // pred_fallthru
      _
    // Predicated region
    $region54: #{_calc_root_jit.1} parent=1 // pred_check
      _
    $region55: #{_calc_root_jit.1} parent=1 // pred_check_branch
      %2696 = sbr.rel (0) target = $region57
    $region56: #{_calc_root_jit.1} parent=1 // pred_region
      _
    $region57: #{_calc_root_jit.1} parent=1 // pred_fallthru
      _
    // Predicated region
    $region58: #{_calc_root_jit.1} parent=1 // pred_check
      _
    $region59: #{_calc_root_jit.1} parent=1 // pred_check_branch
      %2698 = sbr.rel (0) target = $region61
    $region60: #{_calc_root_jit.1} parent=1 // pred_region
      _
    $region61: #{_calc_root_jit.1} parent=1 // pred_fallthru
      _
    %2699 = vsyncpa [#allocation3], 1
    %2700 = vsyncpa [#allocation5], 1

</llo_original>
